<compile_context>
chip_gen: v5e
topology: v5e:2x2
jax: 0.10.0
libtpu: 0.0.40
codegen_flags: <defaults>
</compile_context>

<pallas_src>
import math

import jax
import jax.numpy as jnp
import numpy as np
from jax import lax
from jax.experimental import pallas as pl
from jax.experimental.pallas import tpu as pltpu

# ----------------------------- config ---------------------------------------
B = 2          # batch
S = 8          # sequence length
H = 32         # hidden size
N_HEAD = 4     # attention heads
D_HEAD = H // N_HEAD
INNER = 4 * H  # FFN inner size (= 128)
EPS = 1e-5
T = B * S      # flattened token count
NEG_INF = -1e10


# ----------------------------- kernel helpers --------------------------------
def _layernorm(h, g, b):
    # torch.var defaults to unbiased (correction = 1) -> divisor H-1
    mean = jnp.mean(h, axis=-1, keepdims=True)
    d = h - mean
    var = jnp.sum(d * d, axis=-1, keepdims=True) * (1.0 / (h.shape[-1] - 1))
    # rsqrt goes to the EUP; gamma folded into the per-row scale.
    return d * (g * lax.rsqrt(var + EPS)) + b


def _gelu_tanh(x):
    c = math.sqrt(2.0 / math.pi)
    return 0.5 * x * (1.0 + jnp.tanh(c * (x + 0.044715 * x ** 3)))


# ----------------------------- kernel ----------------------------------------
def transformer_block_kernel(
    x_ref,        # (T, H)
    wqkv_ref,     # (H, 3H)   Q columns pre-scaled by 1/sqrt(D_HEAD)
    wao_ref,      # (H, H)
    wfc_ref,      # (H, INNER)
    wpr_ref,      # (INNER, H)
    vec_ref,      # (8, 128) packed vectors:
                  #   0: ln1_g  1: ln1_b  2: ln2_g  3: ln2_b
                  #   4: b_ao   5: b_pr   6: b_qkv (Q part pre-scaled)  7: b_fc
    mask_ref,     # (T, T) block-diagonal causal additive mask (0 / -1e10)
    o_ref,        # (T, H)
):
    f32 = jnp.float32
    x = x_ref[...]                                      # (T, H)
    vec = vec_ref[...]                                  # (8, 128)

    ln1_g = vec[0:1, :H]
    ln1_b = vec[1:2, :H]
    ln2_g = vec[2:3, :H]
    ln2_b = vec[3:4, :H]
    b_ao = vec[4:5, :H]
    b_pr = vec[5:6, :H]
    b_qkv = vec[6:7, :3 * H]
    b_fc = vec[7:8, :INNER]

    # ---- LN1 ----
    h1 = _layernorm(x, ln1_g, ln1_b)                    # (T, H)

    # ---- attention ----
    # Single QKV projection: (T, H) @ (H, 3H) -> (T, 3H)
    qkv = jnp.dot(h1, wqkv_ref[...], preferred_element_type=f32) + b_qkv

    def to_heads(m):                                    # (T, H) -> (N_HEAD, T, D_HEAD)
        return m.reshape(T, N_HEAD, D_HEAD).transpose(1, 0, 2)

    q = to_heads(qkv[:, 0 * H:1 * H])                   # already scaled by 1/sqrt(d)
    k = to_heads(qkv[:, 1 * H:2 * H])
    v = to_heads(qkv[:, 2 * H:3 * H])

    # Scores batched over heads only; batch separation handled by the mask.
    scores = jnp.einsum('hqd,hkd->hqk', q, k,
                        preferred_element_type=f32) + mask_ref[...][None]  # (N_HEAD, T, T)
    m = jnp.max(scores, axis=-1, keepdims=True)
    p = jnp.exp(scores - m)
    l = jnp.sum(p, axis=-1, keepdims=True)              # (N_HEAD, T, 1)
    ctx = jnp.einsum('hqk,hkd->hqd', p, v,
                     preferred_element_type=f32)        # (N_HEAD, T, D_HEAD)
    ctx = ctx * (1.0 / l)                               # exact softmax normalization

    merged = ctx.transpose(1, 0, 2).reshape(T, H)       # merge heads -> (T, H)
    attn = jnp.dot(merged, wao_ref[...], preferred_element_type=f32) + b_ao

    x1 = x + attn                                       # residual 1

    # ---- LN2 + FFN ----
    h2 = _layernorm(x1, ln2_g, ln2_b)
    ff = jnp.dot(h2, wfc_ref[...], preferred_element_type=f32) + b_fc
    ff = _gelu_tanh(ff)
    ff = jnp.dot(ff, wpr_ref[...], preferred_element_type=f32) + b_pr

    o_ref[...] = x1 + ff                                # residual 2 (one contiguous store)


# ----------------------------- param preparation ------------------------------
def prepare_params(params):
    """One-time layout plumbing: scale folding, vector packing, mask build."""
    scale = 1.0 / math.sqrt(D_HEAD)

    w_qkv = jnp.asarray(params["w_qkv"], jnp.float32)
    w_qkv = w_qkv.at[:, 0:H].multiply(scale)            # fold 1/sqrt(d) into Q columns
    b_qkv = jnp.asarray(params["b_qkv"], jnp.float32).reshape(3 * H)
    b_qkv = b_qkv.at[0:H].multiply(scale)

    def pad_row(v):
        v = jnp.asarray(v, jnp.float32).reshape(-1)
        return jnp.pad(v, (0, INNER - v.shape[0]))

    vec = jnp.stack([
        pad_row(params["ln1_g"]), pad_row(params["ln1_b"]),
        pad_row(params["ln2_g"]), pad_row(params["ln2_b"]),
        pad_row(params["b_ao"]), pad_row(params["b_pr"]),
        pad_row(b_qkv), pad_row(params["b_fc"]),
    ], axis=0)                                           # (8, 128)

    # Block-diagonal causal mask over the flattened token axis.
    tok = np.arange(T)
    same_batch = (tok[:, None] // S) == (tok[None, :] // S)
    causal = tok[None, :] <= tok[:, None]
    mask = jnp.asarray(np.where(same_batch & causal, 0.0, NEG_INF), jnp.float32)

    return {
        "w_qkv": w_qkv,
        "w_ao": jnp.asarray(params["w_ao"], jnp.float32),
        "w_fc": jnp.asarray(params["w_fc"], jnp.float32),
        "w_pr": jnp.asarray(params["w_pr"], jnp.float32),
        "vec": vec,
        "mask": mask,
    }


# ----------------------------- wrapper ----------------------------------------
@jax.jit
def transformer_block(x, prep):
    """x: (B, S, H) float32. prep: output of prepare_params (folded weights)."""
    args = (
        x.reshape(T, H),
        prep["w_qkv"], prep["w_ao"], prep["w_fc"], prep["w_pr"],
        prep["vec"], prep["mask"],
    )
    out2d = pl.pallas_call(
        transformer_block_kernel,
        out_shape=jax.ShapeDtypeStruct((T, H), jnp.float32),
        # single invocation, no grid: everything resident in VMEM (<100 KB total)
        in_specs=[pl.BlockSpec(memory_space=pltpu.MemorySpace.VMEM)] * len(args),
        out_specs=pl.BlockSpec(memory_space=pltpu.MemorySpace.VMEM),
    )(*args)
    return out2d.reshape(B, S, H)


# ----------------------------- pure-JAX reference -----------------------------
def reference_block(x, p):
    def ln(h, g, b):
        mean = jnp.mean(h, axis=-1, keepdims=True)
        var = jnp.sum((h - mean) ** 2, axis=-1, keepdims=True) / (h.shape[-1] - 1)
        return g[0] * (h - mean) / jnp.sqrt(var + EPS) + b[0]

    def gelu(z):
        c = math.sqrt(2.0 / math.pi)
        return 0.5 * z * (1.0 + jnp.tanh(c * (z + 0.044715 * z ** 3)))

    h1 = ln(x, p["ln1_g"], p["ln1_b"])
    qkv = h1 @ p["w_qkv"] + p["b_qkv"][0]
    q, k, v = jnp.split(qkv, 3, axis=-1)

    def heads(t):  # (B,S,H) -> (B,nh,S,dh)
        return t.reshape(B, S, N_HEAD, D_HEAD).transpose(0, 2, 1, 3)

    q, k, v = heads(q), heads(k), heads(v)
    mask = (1.0 - jnp.tril(jnp.ones((S, S)))) * NEG_INF
    scores = q @ k.transpose(0, 1, 3, 2) / math.sqrt(D_HEAD) + mask
    attn = jax.nn.softmax(scores, axis=-1) @ v
    attn = attn.transpose(0, 2, 1, 3).reshape(B, S, H)
    x1 = x + attn @ p["w_ao"] + p["b_ao"][0]

    h2 = ln(x1, p["ln2_g"], p["ln2_b"])
    ff = gelu(h2 @ p["w_fc"] + p["b_fc"][0]) @ p["w_pr"] + p["b_pr"][0]
    return x1 + ff


# ----------------------------- main --------------------------------------------
if __name__ == "__main__":
    key = jax.random.PRNGKey(0)
    keys = jax.random.split(key, 13)

    params = {
        "ln1_g": 1.0 + 0.1 * jax.random.normal(keys[0], (1, H), jnp.float32),
        "ln1_b": 0.1 * jax.random.normal(keys[1], (1, H), jnp.float32),
        "w_qkv": 0.02 * jax.random.normal(keys[2], (H, 3 * H), jnp.float32),
        "b_qkv": 0.02 * jax.random.normal(keys[3], (1, 3 * H), jnp.float32),
        "w_ao":  0.02 * jax.random.normal(keys[4], (H, H), jnp.float32),
        "b_ao":  0.02 * jax.random.normal(keys[5], (1, H), jnp.float32),
        "ln2_g": 1.0 + 0.1 * jax.random.normal(keys[6], (1, H), jnp.float32),
        "ln2_b": 0.1 * jax.random.normal(keys[7], (1, H), jnp.float32),
        "w_fc":  0.02 * jax.random.normal(keys[8], (H, INNER), jnp.float32),
        "b_fc":  0.02 * jax.random.normal(keys[9], (1, INNER), jnp.float32),
        "w_pr":  0.02 * jax.random.normal(keys[10], (INNER, H), jnp.float32),
        "b_pr":  0.02 * jax.random.normal(keys[11], (1, H), jnp.float32),
    }

    x = jax.random.normal(keys[12], (B, S, H), jnp.float32)

    prep = jax.tree_util.tree_map(jax.block_until_ready, prepare_params(params))

    out = jax.block_until_ready(transformer_block(x, prep))
    ref = jax.block_until_ready(reference_block(x, params))

    np.testing.assert_allclose(np.asarray(out), np.asarray(ref), atol=1e-4, rtol=1e-4)

    print("KERNEL_OK")
</pallas_src>

<mosaic_0001>
module attributes {stable_mosaic.version = 11 : i64} {
  func.func @transformer_block_kernel(%arg0: memref<16x32xf32, #tpu.memory_space<vmem>>, %arg1: memref<32x96xf32, #tpu.memory_space<vmem>>, %arg2: memref<32x32xf32, #tpu.memory_space<vmem>>, %arg3: memref<32x128xf32, #tpu.memory_space<vmem>>, %arg4: memref<128x32xf32, #tpu.memory_space<vmem>>, %arg5: memref<8x128xf32, #tpu.memory_space<vmem>>, %arg6: memref<16x16xf32, #tpu.memory_space<vmem>>, %arg7: memref<16x32xf32, #tpu.memory_space<vmem>>) attributes {dimension_semantics = [], scalar_prefetch = 0 : i64, scratch_operands = 0 : i64, tpu.core_type = #tpu.core_type<tc>} {
    %c0 = arith.constant 0 : index
    %c0_0 = arith.constant 0 : index
    %0 = vector.load %arg0[%c0, %c0_0] : memref<16x32xf32, #tpu.memory_space<vmem>>, vector<16x32xf32>
    %c0_1 = arith.constant 0 : index
    %c0_2 = arith.constant 0 : index
    %1 = vector.load %arg5[%c0_1, %c0_2] : memref<8x128xf32, #tpu.memory_space<vmem>>, vector<8x128xf32>
    %2 = vector.extract_strided_slice %1 {offsets = [0, 0], sizes = [1, 32], strides = [1, 1]} : vector<8x128xf32> to vector<1x32xf32>
    %3 = vector.extract_strided_slice %1 {offsets = [1, 0], sizes = [1, 32], strides = [1, 1]} : vector<8x128xf32> to vector<1x32xf32>
    %4 = vector.extract_strided_slice %1 {offsets = [2, 0], sizes = [1, 32], strides = [1, 1]} : vector<8x128xf32> to vector<1x32xf32>
    %5 = vector.extract_strided_slice %1 {offsets = [3, 0], sizes = [1, 32], strides = [1, 1]} : vector<8x128xf32> to vector<1x32xf32>
    %6 = vector.extract_strided_slice %1 {offsets = [4, 0], sizes = [1, 32], strides = [1, 1]} : vector<8x128xf32> to vector<1x32xf32>
    %7 = vector.extract_strided_slice %1 {offsets = [5, 0], sizes = [1, 32], strides = [1, 1]} : vector<8x128xf32> to vector<1x32xf32>
    %8 = vector.extract_strided_slice %1 {offsets = [6, 0], sizes = [1, 96], strides = [1, 1]} : vector<8x128xf32> to vector<1x96xf32>
    %9 = vector.extract_strided_slice %1 {offsets = [7, 0], sizes = [1, 128], strides = [1, 1]} : vector<8x128xf32> to vector<1x128xf32>
    %cst = arith.constant dense<0.000000e+00> : vector<16xf32>
    %10 = vector.multi_reduction <add>, %0, %cst [1] : vector<16x32xf32> to vector<16xf32>
    %11 = vector.shape_cast %10 : vector<16xf32> to vector<16x1xf32>
    %cst_3 = arith.constant 3.200000e+01 : f32
    %12 = vector.broadcast %cst_3 : f32 to vector<16x1xf32>
    %13 = arith.divf %11, %12 : vector<16x1xf32>
    %14 = vector.broadcast %13 : vector<16x1xf32> to vector<16x32xf32>
    %15 = arith.subf %0, %14 : vector<16x32xf32>
    %16 = arith.mulf %15, %15 : vector<16x32xf32>
    %cst_4 = arith.constant dense<0.000000e+00> : vector<16xf32>
    %17 = vector.multi_reduction <add>, %16, %cst_4 [1] : vector<16x32xf32> to vector<16xf32>
    %18 = vector.shape_cast %17 : vector<16xf32> to vector<16x1xf32>
    %cst_5 = arith.constant 0.0322580636 : f32
    %19 = vector.broadcast %cst_5 : f32 to vector<16x1xf32>
    %20 = arith.mulf %18, %19 : vector<16x1xf32>
    %cst_6 = arith.constant 9.99999974E-6 : f32
    %21 = vector.broadcast %cst_6 : f32 to vector<16x1xf32>
    %22 = arith.addf %20, %21 : vector<16x1xf32>
    %23 = math.rsqrt %22 : vector<16x1xf32>
    %24 = vector.broadcast %2 : vector<1x32xf32> to vector<16x32xf32>
    %25 = vector.broadcast %23 : vector<16x1xf32> to vector<16x32xf32>
    %26 = arith.mulf %24, %25 : vector<16x32xf32>
    %27 = arith.mulf %15, %26 : vector<16x32xf32>
    %28 = vector.broadcast %3 : vector<1x32xf32> to vector<16x32xf32>
    %29 = arith.addf %27, %28 : vector<16x32xf32>
    %c0_7 = arith.constant 0 : index
    %c0_8 = arith.constant 0 : index
    %30 = vector.load %arg1[%c0_7, %c0_8] : memref<32x96xf32, #tpu.memory_space<vmem>>, vector<32x96xf32>
    %cst_9 = arith.constant dense<0.000000e+00> : vector<16x96xf32>
    %31 = tpu.matmul %29, %30, %cst_9 {dimension_numbers = #tpu.dot_dimension_numbers<[1], [0], [0], [1], [0, 0, 1, 1], [], []>} : vector<16x32xf32>, vector<32x96xf32>, vector<16x96xf32> -> vector<16x96xf32>
    %32 = vector.broadcast %8 : vector<1x96xf32> to vector<16x96xf32>
    %33 = arith.addf %31, %32 : vector<16x96xf32>
    %34 = vector.extract_strided_slice %33 {offsets = [0, 0], sizes = [16, 32], strides = [1, 1]} : vector<16x96xf32> to vector<16x32xf32>
    %35 = vector.shape_cast %34 : vector<16x32xf32> to vector<16x4x8xf32>
    %36 = tpu.transpose %35, [1, 0, 2] : vector<16x4x8xf32> -> vector<4x16x8xf32>
    %37 = vector.extract_strided_slice %33 {offsets = [0, 32], sizes = [16, 32], strides = [1, 1]} : vector<16x96xf32> to vector<16x32xf32>
    %38 = vector.shape_cast %37 : vector<16x32xf32> to vector<16x4x8xf32>
    %39 = tpu.transpose %38, [1, 0, 2] : vector<16x4x8xf32> -> vector<4x16x8xf32>
    %40 = vector.extract_strided_slice %33 {offsets = [0, 64], sizes = [16, 32], strides = [1, 1]} : vector<16x96xf32> to vector<16x32xf32>
    %41 = vector.shape_cast %40 : vector<16x32xf32> to vector<16x4x8xf32>
    %42 = tpu.transpose %41, [1, 0, 2] : vector<16x4x8xf32> -> vector<4x16x8xf32>
    "tpu.trace_start"() <{level = 10 : i32, message = "hqd,hkd->hqk"}> : () -> ()
    %cst_10 = arith.constant dense<0.000000e+00> : vector<4x16x16xf32>
    %43 = tpu.matmul %36, %39, %cst_10 {dimension_numbers = #tpu.dot_dimension_numbers<[2], [2], [1], [1], [0, 0, 0, 1, 1, 1], [0], [0]>} : vector<4x16x8xf32>, vector<4x16x8xf32>, vector<4x16x16xf32> -> vector<4x16x16xf32>
    "tpu.trace_stop"() : () -> ()
    %c0_11 = arith.constant 0 : index
    %c0_12 = arith.constant 0 : index
    %44 = vector.load %arg6[%c0_11, %c0_12] : memref<16x16xf32, #tpu.memory_space<vmem>>, vector<16x16xf32>
    %45 = vector.shape_cast %44 : vector<16x16xf32> to vector<1x16x16xf32>
    %46 = vector.broadcast %45 : vector<1x16x16xf32> to vector<4x16x16xf32>
    %47 = arith.addf %43, %46 : vector<4x16x16xf32>
    %cst_13 = arith.constant dense<0xFF800000> : vector<4x16xf32>
    %48 = vector.multi_reduction <maximumf>, %47, %cst_13 [2] : vector<4x16x16xf32> to vector<4x16xf32>
    %49 = vector.shape_cast %48 : vector<4x16xf32> to vector<4x16x1xf32>
    %50 = vector.broadcast %49 : vector<4x16x1xf32> to vector<4x16x16xf32>
    %51 = arith.subf %47, %50 : vector<4x16x16xf32>
    %52 = math.exp %51 : vector<4x16x16xf32>
    %cst_14 = arith.constant dense<0.000000e+00> : vector<4x16xf32>
    %53 = vector.multi_reduction <add>, %52, %cst_14 [2] : vector<4x16x16xf32> to vector<4x16xf32>
    %54 = vector.shape_cast %53 : vector<4x16xf32> to vector<4x16x1xf32>
    "tpu.trace_start"() <{level = 10 : i32, message = "hqk,hkd->hqd"}> : () -> ()
    %cst_15 = arith.constant dense<0.000000e+00> : vector<4x16x8xf32>
    %55 = tpu.matmul %52, %42, %cst_15 {dimension_numbers = #tpu.dot_dimension_numbers<[2], [1], [1], [2], [0, 0, 0, 1, 1, 2], [0], [0]>} : vector<4x16x16xf32>, vector<4x16x8xf32>, vector<4x16x8xf32> -> vector<4x16x8xf32>
    "tpu.trace_stop"() : () -> ()
    %cst_16 = arith.constant 1.000000e+00 : f32
    %56 = vector.broadcast %cst_16 : f32 to vector<4x16x1xf32>
    %57 = arith.divf %56, %54 : vector<4x16x1xf32>
    %58 = vector.broadcast %57 : vector<4x16x1xf32> to vector<4x16x8xf32>
    %59 = arith.mulf %55, %58 : vector<4x16x8xf32>
    %60 = tpu.transpose %59, [1, 0, 2] : vector<4x16x8xf32> -> vector<16x4x8xf32>
    %61 = vector.shape_cast %60 : vector<16x4x8xf32> to vector<16x32xf32>
    %c0_17 = arith.constant 0 : index
    %c0_18 = arith.constant 0 : index
    %62 = vector.load %arg2[%c0_17, %c0_18] : memref<32x32xf32, #tpu.memory_space<vmem>>, vector<32x32xf32>
    %cst_19 = arith.constant dense<0.000000e+00> : vector<16x32xf32>
    %63 = tpu.matmul %61, %62, %cst_19 {dimension_numbers = #tpu.dot_dimension_numbers<[1], [0], [0], [1], [0, 0, 1, 1], [], []>} : vector<16x32xf32>, vector<32x32xf32>, vector<16x32xf32> -> vector<16x32xf32>
    %64 = vector.broadcast %6 : vector<1x32xf32> to vector<16x32xf32>
    %65 = arith.addf %63, %64 : vector<16x32xf32>
    %66 = arith.addf %0, %65 : vector<16x32xf32>
    %cst_20 = arith.constant dense<0.000000e+00> : vector<16xf32>
    %67 = vector.multi_reduction <add>, %66, %cst_20 [1] : vector<16x32xf32> to vector<16xf32>
    %68 = vector.shape_cast %67 : vector<16xf32> to vector<16x1xf32>
    %cst_21 = arith.constant 3.200000e+01 : f32
    %69 = vector.broadcast %cst_21 : f32 to vector<16x1xf32>
    %70 = arith.divf %68, %69 : vector<16x1xf32>
    %71 = vector.broadcast %70 : vector<16x1xf32> to vector<16x32xf32>
    %72 = arith.subf %66, %71 : vector<16x32xf32>
    %73 = arith.mulf %72, %72 : vector<16x32xf32>
    %cst_22 = arith.constant dense<0.000000e+00> : vector<16xf32>
    %74 = vector.multi_reduction <add>, %73, %cst_22 [1] : vector<16x32xf32> to vector<16xf32>
    %75 = vector.shape_cast %74 : vector<16xf32> to vector<16x1xf32>
    %cst_23 = arith.constant 0.0322580636 : f32
    %76 = vector.broadcast %cst_23 : f32 to vector<16x1xf32>
    %77 = arith.mulf %75, %76 : vector<16x1xf32>
    %cst_24 = arith.constant 9.99999974E-6 : f32
    %78 = vector.broadcast %cst_24 : f32 to vector<16x1xf32>
    %79 = arith.addf %77, %78 : vector<16x1xf32>
    %80 = math.rsqrt %79 : vector<16x1xf32>
    %81 = vector.broadcast %4 : vector<1x32xf32> to vector<16x32xf32>
    %82 = vector.broadcast %80 : vector<16x1xf32> to vector<16x32xf32>
    %83 = arith.mulf %81, %82 : vector<16x32xf32>
    %84 = arith.mulf %72, %83 : vector<16x32xf32>
    %85 = vector.broadcast %5 : vector<1x32xf32> to vector<16x32xf32>
    %86 = arith.addf %84, %85 : vector<16x32xf32>
    %c0_25 = arith.constant 0 : index
    %c0_26 = arith.constant 0 : index
    %87 = vector.load %arg3[%c0_25, %c0_26] : memref<32x128xf32, #tpu.memory_space<vmem>>, vector<32x128xf32>
    %cst_27 = arith.constant dense<0.000000e+00> : vector<16x128xf32>
    %88 = tpu.matmul %86, %87, %cst_27 {dimension_numbers = #tpu.dot_dimension_numbers<[1], [0], [0], [1], [0, 0, 1, 1], [], []>} : vector<16x32xf32>, vector<32x128xf32>, vector<16x128xf32> -> vector<16x128xf32>
    %89 = vector.broadcast %9 : vector<1x128xf32> to vector<16x128xf32>
    %90 = arith.addf %88, %89 : vector<16x128xf32>
    %cst_28 = arith.constant 5.000000e-01 : f32
    %91 = vector.broadcast %cst_28 : f32 to vector<16x128xf32>
    %92 = arith.mulf %91, %90 : vector<16x128xf32>
    %93 = arith.mulf %90, %90 : vector<16x128xf32>
    %94 = arith.mulf %90, %93 : vector<16x128xf32>
    %cst_29 = arith.constant 4.471500e-02 : f32
    %95 = vector.broadcast %cst_29 : f32 to vector<16x128xf32>
    %96 = arith.mulf %95, %94 : vector<16x128xf32>
    %97 = arith.addf %90, %96 : vector<16x128xf32>
    %cst_30 = arith.constant 0.797884583 : f32
    %98 = vector.broadcast %cst_30 : f32 to vector<16x128xf32>
    %99 = arith.mulf %98, %97 : vector<16x128xf32>
    %100 = math.tanh %99 : vector<16x128xf32>
    %cst_31 = arith.constant 1.000000e+00 : f32
    %101 = vector.broadcast %cst_31 : f32 to vector<16x128xf32>
    %102 = arith.addf %101, %100 : vector<16x128xf32>
    %103 = arith.mulf %92, %102 : vector<16x128xf32>
    %c0_32 = arith.constant 0 : index
    %c0_33 = arith.constant 0 : index
    %104 = vector.load %arg4[%c0_32, %c0_33] : memref<128x32xf32, #tpu.memory_space<vmem>>, vector<128x32xf32>
    %cst_34 = arith.constant dense<0.000000e+00> : vector<16x32xf32>
    %105 = tpu.matmul %103, %104, %cst_34 {dimension_numbers = #tpu.dot_dimension_numbers<[1], [0], [0], [1], [0, 0, 1, 1], [], []>} : vector<16x128xf32>, vector<128x32xf32>, vector<16x32xf32> -> vector<16x32xf32>
    %106 = vector.broadcast %7 : vector<1x32xf32> to vector<16x32xf32>
    %107 = arith.addf %105, %106 : vector<16x32xf32>
    %108 = arith.addf %66, %107 : vector<16x32xf32>
    %c0_35 = arith.constant 0 : index
    %c0_36 = arith.constant 0 : index
    %109 = vector.load %arg7[%c0_35, %c0_36] : memref<16x32xf32, #tpu.memory_space<vmem>>, vector<16x32xf32>
    tpu.vector_store %arg7[%c0_35, %c0_36], %108 {strides = array<i32>} : memref<16x32xf32, #tpu.memory_space<vmem>>, vector<16x32xf32>,
    return
  }
}

</mosaic_0001>

<llo_original>
// kernel: transformer_block.1
$region0: #{transformer_block.1}
  #allocation0 [shape = 'u32[]', space=smem, size = 0x4, offset = 0x4, fixed_abs, tag = 'smem constant byte address 0x4 - core index']
  #allocation1 [shape = 'u32[72,128]{1,0:T(1,128)}', space=vmem, size = 0x9000, scoped, tag = 'internal scratch']
  %s0 = inlined_call_operand.vmem [shape: f32[16,32], index: 0, kind: input, shape index: {}]
  %s1 = inlined_call_operand.vmem [shape: f32[32,96], index: 1, kind: input, shape index: {}]
  %s2 = inlined_call_operand.vmem [shape: f32[32,32], index: 2, kind: input, shape index: {}]
  %s3 = inlined_call_operand.vmem [shape: f32[32,128], index: 3, kind: input, shape index: {}]
  %s4 = inlined_call_operand.vmem [shape: f32[128,32], index: 4, kind: input, shape index: {}]
  %s5 = inlined_call_operand.vmem [shape: f32[8,128], index: 5, kind: input, shape index: {}]
  %s6 = inlined_call_operand.vmem [shape: f32[16,16], index: 6, kind: input, shape index: {}]
  %s7 = inlined_call_operand.hbm [shape: f32[16,32], index: 7, kind: output, shape index: {}]
  %s8 = sld [smem:[#allocation0]]
  $region38: #{transformer_block.1} parent=0
    _
  %s10 = ssub.s32 1, %s8
  %s11 = scalar_select 0, %s10, %s8
  $region1: #{transformer_block.1} parent=0
    #allocation2 [shape = 'u8[8192]{0}', space=vmem, size = 0x2000, scoped, tag = 'output window, operand 0, single buffered']
    #allocation3 [shape = 's32[1]{0}', space=sflag, size = 0x4, scoped, tag = 'scoped memory for transformer_block.1']
    %12 = vsyncpa [#allocation3], 0
    // Predicated region
    $region2: #{transformer_block.1} parent=1 // pred_check
      _
    $region3: #{transformer_block.1} parent=1 // pred_check_branch
      %14 = sbr.rel (0) target = $region5
    $region4: #{transformer_block.1} parent=1 // pred_region
      _
    $region5: #{transformer_block.1} parent=1 // pred_fallthru
      _
    // Predicated region
    $region6: #{transformer_block.1} parent=1 // pred_check
      _
    $region7: #{transformer_block.1} parent=1 // pred_check_branch
      %16 = sbr.rel (0) target = $region9
    $region8: #{transformer_block.1} parent=1 // pred_region
      _
    $region9: #{transformer_block.1} parent=1 // pred_fallthru
      _
    // Predicated region
    $region10: #{transformer_block.1} parent=1 // pred_check
      _
    $region11: #{transformer_block.1} parent=1 // pred_check_branch
      %18 = sbr.rel (0) target = $region13
    $region12: #{transformer_block.1} parent=1 // pred_region
      _
    $region13: #{transformer_block.1} parent=1 // pred_fallthru
      _
    // Predicated region
    $region14: #{transformer_block.1} parent=1 // pred_check
      _
    $region15: #{transformer_block.1} parent=1 // pred_check_branch
      %20 = sbr.rel (0) target = $region17
    $region16: #{transformer_block.1} parent=1 // pred_region
      _
    $region17: #{transformer_block.1} parent=1 // pred_fallthru
      _
    // Predicated region
    $region18: #{transformer_block.1} parent=1 // pred_check
      _
    $region19: #{transformer_block.1} parent=1 // pred_check_branch
      %22 = sbr.rel (0) target = $region21
    $region20: #{transformer_block.1} parent=1 // pred_region
      _
    $region21: #{transformer_block.1} parent=1 // pred_fallthru
      _
    // Predicated region
    $region22: #{transformer_block.1} parent=1 // pred_check
      _
    $region23: #{transformer_block.1} parent=1 // pred_check_branch
      %24 = sbr.rel (0) target = $region25
    $region24: #{transformer_block.1} parent=1 // pred_region
      _
    $region25: #{transformer_block.1} parent=1 // pred_fallthru
      _
    // Predicated region
    $region26: #{transformer_block.1} parent=1 // pred_check
      _
    $region27: #{transformer_block.1} parent=1 // pred_check_branch
      %26 = sbr.rel (0) target = $region29
    $region28: #{transformer_block.1} parent=1 // pred_region
      _
    $region29: #{transformer_block.1} parent=1 // pred_fallthru
      _
    %v27 = vld [vmem:[%s0] sm:$0xff]
    %v28 = vld [vmem:[%s0 + $0x8] sm:$0xff]
    %v29 = vld [vmem:[%s5] sm:$0xff]
    %vm30 = vcmask 261120
    %v31 = vsel %vm30, %v27, 0.0
    %32 = vadd.xlane.f32.xlu0 %v31
    %v33 = vpop.xlane.xlu0 %32
    %v34 = vsel %vm30, %v28, 0.0
    %35 = vadd.xlane.f32.xlu0 %v34
    %v36 = vpop.xlane.xlu0 %35
    %v37 = vrcp.pop 32.0
    %v38 = vmul.f32 32.0, %v37
    %v39 = vsub.f32 1.0, %v38
    %v40 = vmul.f32 %v37, %v39
    %v41 = vadd.f32 %v37, %v40
    %vm42 = vweird.f32 %v37
    %v43 = vsel %vm42, %v37, %v41
    %v44 = vmul.f32 %v33, %v43
    %v45 = vmul.f32 %v36, %v43
    %v46 = vsub.f32 %v27, %v44
    %v47 = vsub.f32 %v28, %v45
    %v48 = vmul.f32 %v46, %v46
    %v49 = vmul.f32 %v47, %v47
    %v50 = vsel %vm30, %v48, 0.0
    %51 = vadd.xlane.f32.xlu0 %v50
    %v52 = vpop.xlane.xlu0 %51
    %v53 = vsel %vm30, %v49, 0.0
    %54 = vadd.xlane.f32.xlu0 %v53
    %v55 = vpop.xlane.xlu0 %54
    %v56 = vmul.f32 %v52, 0.032258064
    %v57 = vmul.f32 %v55, 0.032258064
    %v58 = vadd.f32 %v56, 1e-05
    %v59 = vadd.f32 %v57, 1e-05
    %v60 = vrsqrt.pop %v58
    %v61 = vmul.f32 %v60, %v58
    %v62 = vmul.f32 %v61, %v60
    %v63 = vmul.f32 0.5, %v62
    %v64 = vsub.f32 1.5, %v63
    %v65 = vmul.f32 %v60, %v64
    %vm66 = vweird.f32 %v58
    %vm67 = vweird.f32 %v60
    %vm68 = vmor %vm66, %vm67
    %v69 = vsel %vm68, %v60, %v65
    %v70 = vrsqrt.pop %v59
    %v71 = vmul.f32 %v70, %v59
    %v72 = vmul.f32 %v71, %v70
    %v73 = vmul.f32 0.5, %v72
    %v74 = vsub.f32 1.5, %v73
    %v75 = vmul.f32 %v70, %v74
    %vm76 = vweird.f32 %v59
    %vm77 = vweird.f32 %v70
    %vm78 = vmor %vm76, %vm77
    %v79 = vsel %vm78, %v70, %v75
    %v80 = vperm.slane %v29, 0
    %v81 = vmul.f32 %v80, %v69
    %v82 = vmul.f32 %v80, %v79
    %v83 = vmul.f32 %v46, %v81
    %v84 = vmul.f32 %v47, %v82
    %v85 = vperm.slane %v29, 1
    %v86 = vadd.f32 %v83, %v85
    %v87 = vadd.f32 %v84, %v85
    %v88 = vld [vmem:[%s1] sm:$0xff]
    %v89 = vld [vmem:[%s1 + $0x8] sm:$0xff]
    %v90 = vld [vmem:[%s1 + $0x10] sm:$0xff]
    %v91 = vld [vmem:[%s1 + $0x18] sm:$0xff]
    %v92 = vperm.slane %v29, 6
    %v94 = vsel %vm30, %v86, 0
    %v97 = vsel %vm30, %v87, 0
    %99 = vmatpush.msra.mxu0 0.0
    %100 = vmatpush.msra.mxu0 0.0
    %101 = vmatpush.msra.mxu0 0.0
    %102 = vmatpush.msra.mxu0 0.0
    %103 = vmatpush.msra.mxu0 0.0
    %104 = vmatpush.msra.mxu0 0.0
    %105 = vmatpush.msra.mxu0 0.0
    %106 = vmatpush.msra.mxu0 0.0
    %107 = vmatpush.msra.mxu0 0.0
    %108 = vmatpush.msra.mxu0 0.0
    %109 = vmatpush.msra.mxu0 0.0
    %110 = vmatpush.msra.mxu0 0.0
    %111 = vmatpush.msra.mxu0 %v91
    %112 = vmatpush.msra.mxu0 %v90
    %113 = vmatpush.msra.mxu0 %v89
    %114 = vmatpush.msra.mxu0 %v88
    %115 = vmatmul.f32.gmra.mxu0 %v94
    %v116 = vpop.f32.mrf.mxu0
    %v117 = vadd.f32 %v92, %v116
    %118 = vmatmul.f32.gmra.mxu0 %v97
    %v119 = vpop.f32.mrf.mxu0
    %v120 = vadd.f32 %v92, %v119
    %121 = vdwg.mxu0
    %124 = vrot.lane.b32.xlu0 %v117, 120
    %v125 = vpop.permute.xlu0 %124
    %126 = vrot.lane.b32.xlu0 %v120, 120
    %v127 = vpop.permute.xlu0 %126
    %130 = vrot.lane.b32.xlu0 %v117, 112
    %v131 = vpop.permute.xlu0 %130
    %132 = vrot.lane.b32.xlu0 %v120, 112
    %v133 = vpop.permute.xlu0 %132
    %136 = vrot.lane.b32.xlu0 %v117, 104
    %v137 = vpop.permute.xlu0 %136
    %138 = vrot.lane.b32.xlu0 %v120, 104
    %v139 = vpop.permute.xlu0 %138
    %v142 = vrot.slane %v131, 4
    %vm143 = vcmask 1047556
    %v144 = vsel %vm143, %v142, %v117
    %v145 = vrot.slane %v117, 4
    %v146 = vsel %vm143, %v131, %v145
    %v148 = vunpack.c.l.s4 1983009808
    %v149 = vunpack.c.0.s8 %v148
    %v150 = vperm.slane %v144, %v149
    %v152 = vunpack.c.l.s4 1983009808
    %v153 = vunpack.c.0.s8 %v152
    %v154 = vperm.slane %v146, %v153
    %v155 = vrot.slane %v137, 4
    %v156 = vsel %vm143, %v155, %v125
    %v157 = vrot.slane %v125, 4
    %v158 = vsel %vm143, %v137, %v157
    %v160 = vunpack.c.l.s4 1983009808
    %v161 = vunpack.c.0.s8 %v160
    %v162 = vperm.slane %v156, %v161
    %v164 = vunpack.c.l.s4 1983009808
    %v165 = vunpack.c.0.s8 %v164
    %v166 = vperm.slane %v158, %v165
    %v167 = vrot.slane %v162, 4
    %v168 = vsel %vm143, %v167, %v150
    %v169 = vrot.slane %v150, 4
    %v170 = vsel %vm143, %v162, %v169
    %v172 = vunpack.c.l.s4 1934713408
    %v173 = vunpack.c.0.s8 %v172
    %v174 = vperm.slane %v168, %v173
    %v176 = vunpack.c.l.s4 1934713408
    %v177 = vunpack.c.0.s8 %v176
    %v178 = vperm.slane %v170, %v177
    %v179 = vrot.slane %v166, 4
    %v180 = vsel %vm143, %v179, %v154
    %v181 = vrot.slane %v154, 4
    %v182 = vsel %vm143, %v166, %v181
    %v184 = vunpack.c.l.s4 1934713408
    %v185 = vunpack.c.0.s8 %v184
    %v186 = vperm.slane %v180, %v185
    %v188 = vunpack.c.l.s4 1934713408
    %v189 = vunpack.c.0.s8 %v188
    %v190 = vperm.slane %v182, %v189
    %v191 = vrot.slane %v174, 4
    %v192 = vsel %vm143, 0.0, %v191
    %v193 = vrot.slane %v178, 4
    %v194 = vsel %vm143, 0.0, %v193
    %v195 = vrot.slane %v186, 4
    %v196 = vsel %vm143, 0.0, %v195
    %v197 = vrot.slane %v190, 4
    %v198 = vsel %vm143, 0.0, %v197
    %v199 = vrot.slane %v133, 4
    %v200 = vsel %vm143, %v199, %v120
    %v201 = vrot.slane %v120, 4
    %v202 = vsel %vm143, %v133, %v201
    %v204 = vunpack.c.l.s4 1983009808
    %v205 = vunpack.c.0.s8 %v204
    %v206 = vperm.slane %v200, %v205
    %v208 = vunpack.c.l.s4 1983009808
    %v209 = vunpack.c.0.s8 %v208
    %v210 = vperm.slane %v202, %v209
    %v211 = vrot.slane %v139, 4
    %v212 = vsel %vm143, %v211, %v127
    %v213 = vrot.slane %v127, 4
    %v214 = vsel %vm143, %v139, %v213
    %v216 = vunpack.c.l.s4 1983009808
    %v217 = vunpack.c.0.s8 %v216
    %v218 = vperm.slane %v212, %v217
    %v220 = vunpack.c.l.s4 1983009808
    %v221 = vunpack.c.0.s8 %v220
    %v222 = vperm.slane %v214, %v221
    %v223 = vrot.slane %v218, 4
    %v224 = vsel %vm143, %v223, %v206
    %v225 = vrot.slane %v206, 4
    %v226 = vsel %vm143, %v218, %v225
    %v228 = vunpack.c.l.s4 1934713408
    %v229 = vunpack.c.0.s8 %v228
    %v230 = vperm.slane %v224, %v229
    %v232 = vunpack.c.l.s4 1934713408
    %v233 = vunpack.c.0.s8 %v232
    %v234 = vperm.slane %v226, %v233
    %v235 = vrot.slane %v222, 4
    %v236 = vsel %vm143, %v235, %v210
    %v237 = vrot.slane %v210, 4
    %v238 = vsel %vm143, %v222, %v237
    %v240 = vunpack.c.l.s4 1934713408
    %v241 = vunpack.c.0.s8 %v240
    %v242 = vperm.slane %v236, %v241
    %v244 = vunpack.c.l.s4 1934713408
    %v245 = vunpack.c.0.s8 %v244
    %v246 = vperm.slane %v238, %v245
    %v247 = vrot.slane %v230, 4
    %v248 = vsel %vm143, 0.0, %v247
    %v249 = vrot.slane %v234, 4
    %v250 = vsel %vm143, 0.0, %v249
    %v251 = vrot.slane %v242, 4
    %v252 = vsel %vm143, 0.0, %v251
    %v253 = vrot.slane %v246, 4
    %v254 = vsel %vm143, 0.0, %v253
    %v255 = vsel %vm143, %v193, %v174
    %v257 = vunpack.c.l.s4 1983009808
    %v258 = vunpack.c.0.s8 %v257
    %v259 = vperm.slane %v255, %v258
    %v260 = vrot.slane %v194, 4
    %v261 = vsel %vm143, %v260, %v192
    %v263 = vunpack.c.l.s4 1983009808
    %v264 = vunpack.c.0.s8 %v263
    %v265 = vperm.slane %v261, %v264
    %v266 = vsel %vm143, %v197, %v186
    %v268 = vunpack.c.l.s4 1983009808
    %v269 = vunpack.c.0.s8 %v268
    %v270 = vperm.slane %v266, %v269
    %v271 = vrot.slane %v198, 4
    %v272 = vsel %vm143, %v271, %v196
    %v274 = vunpack.c.l.s4 1983009808
    %v275 = vunpack.c.0.s8 %v274
    %v276 = vperm.slane %v272, %v275
    %v277 = vrot.slane %v265, 4
    %v278 = vsel %vm143, %v277, %v259
    %v279 = vrot.slane %v259, 4
    %v280 = vsel %vm143, %v265, %v279
    %v282 = vunpack.c.l.s4 1934713408
    %v283 = vunpack.c.0.s8 %v282
    %v284 = vperm.slane %v278, %v283
    %v286 = vunpack.c.l.s4 1934713408
    %v287 = vunpack.c.0.s8 %v286
    %v288 = vperm.slane %v280, %v287
    %v289 = vrot.slane %v276, 4
    %v290 = vsel %vm143, %v289, %v270
    %v291 = vrot.slane %v270, 4
    %v292 = vsel %vm143, %v276, %v291
    %v294 = vunpack.c.l.s4 1934713408
    %v295 = vunpack.c.0.s8 %v294
    %v296 = vperm.slane %v290, %v295
    %v298 = vunpack.c.l.s4 1934713408
    %v299 = vunpack.c.0.s8 %v298
    %v300 = vperm.slane %v292, %v299
    %v301 = vrot.slane %v296, 4
    %v302 = vsel %vm143, %v301, %v284
    %v303 = vrot.slane %v284, 4
    %v304 = vsel %vm143, %v296, %v303
    %v305 = vrot.slane %v300, 4
    %v306 = vsel %vm143, %v305, %v288
    %v307 = vrot.slane %v288, 4
    %v308 = vsel %vm143, %v300, %v307
    %v309 = vsel %vm143, %v249, %v230
    %v311 = vunpack.c.l.s4 1983009808
    %v312 = vunpack.c.0.s8 %v311
    %v313 = vperm.slane %v309, %v312
    %v314 = vrot.slane %v250, 4
    %v315 = vsel %vm143, %v314, %v248
    %v317 = vunpack.c.l.s4 1983009808
    %v318 = vunpack.c.0.s8 %v317
    %v319 = vperm.slane %v315, %v318
    %v320 = vsel %vm143, %v253, %v242
    %v322 = vunpack.c.l.s4 1983009808
    %v323 = vunpack.c.0.s8 %v322
    %v324 = vperm.slane %v320, %v323
    %v325 = vrot.slane %v254, 4
    %v326 = vsel %vm143, %v325, %v252
    %v328 = vunpack.c.l.s4 1983009808
    %v329 = vunpack.c.0.s8 %v328
    %v330 = vperm.slane %v326, %v329
    %v331 = vrot.slane %v319, 4
    %v332 = vsel %vm143, %v331, %v313
    %v333 = vrot.slane %v313, 4
    %v334 = vsel %vm143, %v319, %v333
    %v336 = vunpack.c.l.s4 1934713408
    %v337 = vunpack.c.0.s8 %v336
    %v338 = vperm.slane %v332, %v337
    %v340 = vunpack.c.l.s4 1934713408
    %v341 = vunpack.c.0.s8 %v340
    %v342 = vperm.slane %v334, %v341
    %v343 = vrot.slane %v330, 4
    %v344 = vsel %vm143, %v343, %v324
    %v345 = vrot.slane %v324, 4
    %v346 = vsel %vm143, %v330, %v345
    %v348 = vunpack.c.l.s4 1934713408
    %v349 = vunpack.c.0.s8 %v348
    %v350 = vperm.slane %v344, %v349
    %v352 = vunpack.c.l.s4 1934713408
    %v353 = vunpack.c.0.s8 %v352
    %v354 = vperm.slane %v346, %v353
    %v355 = vrot.slane %v350, 4
    %v356 = vsel %vm143, %v355, %v338
    %v357 = vrot.slane %v338, 4
    %v358 = vsel %vm143, %v350, %v357
    %v359 = vrot.slane %v354, 4
    %v360 = vsel %vm143, %v359, %v342
    %v361 = vrot.slane %v342, 4
    %v362 = vsel %vm143, %v354, %v361
    %363 = vrot.lane.b32.xlu0 %v117, 96
    %v364 = vpop.permute.xlu0 %363
    %365 = vrot.lane.b32.xlu0 %v120, 96
    %v366 = vpop.permute.xlu0 %365
    %367 = vrot.lane.b32.xlu0 %v125, 96
    %v368 = vpop.permute.xlu0 %367
    %369 = vrot.lane.b32.xlu0 %v127, 96
    %v370 = vpop.permute.xlu0 %369
    %371 = vrot.lane.b32.xlu0 %v131, 96
    %v372 = vpop.permute.xlu0 %371
    %373 = vrot.lane.b32.xlu0 %v133, 96
    %v374 = vpop.permute.xlu0 %373
    %375 = vrot.lane.b32.xlu0 %v137, 96
    %v376 = vpop.permute.xlu0 %375
    %377 = vrot.lane.b32.xlu0 %v139, 96
    %v378 = vpop.permute.xlu0 %377
    %v387 = vrot.slane %v372, 4
    %v388 = vsel %vm143, %v387, %v364
    %v389 = vrot.slane %v364, 4
    %v390 = vsel %vm143, %v372, %v389
    %v392 = vunpack.c.l.s4 1983009808
    %v393 = vunpack.c.0.s8 %v392
    %v394 = vperm.slane %v388, %v393
    %v396 = vunpack.c.l.s4 1983009808
    %v397 = vunpack.c.0.s8 %v396
    %v398 = vperm.slane %v390, %v397
    %v399 = vrot.slane %v376, 4
    %v400 = vsel %vm143, %v399, %v368
    %v401 = vrot.slane %v368, 4
    %v402 = vsel %vm143, %v376, %v401
    %v404 = vunpack.c.l.s4 1983009808
    %v405 = vunpack.c.0.s8 %v404
    %v406 = vperm.slane %v400, %v405
    %v408 = vunpack.c.l.s4 1983009808
    %v409 = vunpack.c.0.s8 %v408
    %v410 = vperm.slane %v402, %v409
    %v411 = vrot.slane %v406, 4
    %v412 = vsel %vm143, %v411, %v394
    %v413 = vrot.slane %v394, 4
    %v414 = vsel %vm143, %v406, %v413
    %v416 = vunpack.c.l.s4 1934713408
    %v417 = vunpack.c.0.s8 %v416
    %v418 = vperm.slane %v412, %v417
    %v420 = vunpack.c.l.s4 1934713408
    %v421 = vunpack.c.0.s8 %v420
    %v422 = vperm.slane %v414, %v421
    %v423 = vrot.slane %v410, 4
    %v424 = vsel %vm143, %v423, %v398
    %v425 = vrot.slane %v398, 4
    %v426 = vsel %vm143, %v410, %v425
    %v428 = vunpack.c.l.s4 1934713408
    %v429 = vunpack.c.0.s8 %v428
    %v430 = vperm.slane %v424, %v429
    %v432 = vunpack.c.l.s4 1934713408
    %v433 = vunpack.c.0.s8 %v432
    %v434 = vperm.slane %v426, %v433
    %v435 = vrot.slane %v418, 4
    %v436 = vsel %vm143, 0.0, %v435
    %v437 = vrot.slane %v422, 4
    %v438 = vsel %vm143, 0.0, %v437
    %v439 = vrot.slane %v430, 4
    %v440 = vsel %vm143, 0.0, %v439
    %v441 = vrot.slane %v434, 4
    %v442 = vsel %vm143, 0.0, %v441
    %v443 = vrot.slane %v374, 4
    %v444 = vsel %vm143, %v443, %v366
    %v445 = vrot.slane %v366, 4
    %v446 = vsel %vm143, %v374, %v445
    %v448 = vunpack.c.l.s4 1983009808
    %v449 = vunpack.c.0.s8 %v448
    %v450 = vperm.slane %v444, %v449
    %v452 = vunpack.c.l.s4 1983009808
    %v453 = vunpack.c.0.s8 %v452
    %v454 = vperm.slane %v446, %v453
    %v455 = vrot.slane %v378, 4
    %v456 = vsel %vm143, %v455, %v370
    %v457 = vrot.slane %v370, 4
    %v458 = vsel %vm143, %v378, %v457
    %v460 = vunpack.c.l.s4 1983009808
    %v461 = vunpack.c.0.s8 %v460
    %v462 = vperm.slane %v456, %v461
    %v464 = vunpack.c.l.s4 1983009808
    %v465 = vunpack.c.0.s8 %v464
    %v466 = vperm.slane %v458, %v465
    %v467 = vrot.slane %v462, 4
    %v468 = vsel %vm143, %v467, %v450
    %v469 = vrot.slane %v450, 4
    %v470 = vsel %vm143, %v462, %v469
    %v472 = vunpack.c.l.s4 1934713408
    %v473 = vunpack.c.0.s8 %v472
    %v474 = vperm.slane %v468, %v473
    %v476 = vunpack.c.l.s4 1934713408
    %v477 = vunpack.c.0.s8 %v476
    %v478 = vperm.slane %v470, %v477
    %v479 = vrot.slane %v466, 4
    %v480 = vsel %vm143, %v479, %v454
    %v481 = vrot.slane %v454, 4
    %v482 = vsel %vm143, %v466, %v481
    %v484 = vunpack.c.l.s4 1934713408
    %v485 = vunpack.c.0.s8 %v484
    %v486 = vperm.slane %v480, %v485
    %v488 = vunpack.c.l.s4 1934713408
    %v489 = vunpack.c.0.s8 %v488
    %v490 = vperm.slane %v482, %v489
    %v491 = vrot.slane %v474, 4
    %v492 = vsel %vm143, 0.0, %v491
    %v493 = vrot.slane %v478, 4
    %v494 = vsel %vm143, 0.0, %v493
    %v495 = vrot.slane %v486, 4
    %v496 = vsel %vm143, 0.0, %v495
    %v497 = vrot.slane %v490, 4
    %v498 = vsel %vm143, 0.0, %v497
    %v499 = vsel %vm143, %v437, %v418
    %v501 = vunpack.c.l.s4 1983009808
    %v502 = vunpack.c.0.s8 %v501
    %v503 = vperm.slane %v499, %v502
    %v504 = vrot.slane %v438, 4
    %v505 = vsel %vm143, %v504, %v436
    %v507 = vunpack.c.l.s4 1983009808
    %v508 = vunpack.c.0.s8 %v507
    %v509 = vperm.slane %v505, %v508
    %v510 = vsel %vm143, %v441, %v430
    %v512 = vunpack.c.l.s4 1983009808
    %v513 = vunpack.c.0.s8 %v512
    %v514 = vperm.slane %v510, %v513
    %v515 = vrot.slane %v442, 4
    %v516 = vsel %vm143, %v515, %v440
    %v518 = vunpack.c.l.s4 1983009808
    %v519 = vunpack.c.0.s8 %v518
    %v520 = vperm.slane %v516, %v519
    %v521 = vrot.slane %v509, 4
    %v522 = vsel %vm143, %v521, %v503
    %v523 = vrot.slane %v503, 4
    %v524 = vsel %vm143, %v509, %v523
    %v526 = vunpack.c.l.s4 1934713408
    %v527 = vunpack.c.0.s8 %v526
    %v528 = vperm.slane %v522, %v527
    %v530 = vunpack.c.l.s4 1934713408
    %v531 = vunpack.c.0.s8 %v530
    %v532 = vperm.slane %v524, %v531
    %v533 = vrot.slane %v520, 4
    %v534 = vsel %vm143, %v533, %v514
    %v535 = vrot.slane %v514, 4
    %v536 = vsel %vm143, %v520, %v535
    %v538 = vunpack.c.l.s4 1934713408
    %v539 = vunpack.c.0.s8 %v538
    %v540 = vperm.slane %v534, %v539
    %v542 = vunpack.c.l.s4 1934713408
    %v543 = vunpack.c.0.s8 %v542
    %v544 = vperm.slane %v536, %v543
    %v545 = vrot.slane %v540, 4
    %v546 = vsel %vm143, %v545, %v528
    %v547 = vrot.slane %v528, 4
    %v548 = vsel %vm143, %v540, %v547
    %v549 = vrot.slane %v544, 4
    %v550 = vsel %vm143, %v549, %v532
    %v551 = vrot.slane %v532, 4
    %v552 = vsel %vm143, %v544, %v551
    %v553 = vsel %vm143, %v493, %v474
    %v555 = vunpack.c.l.s4 1983009808
    %v556 = vunpack.c.0.s8 %v555
    %v557 = vperm.slane %v553, %v556
    %v558 = vrot.slane %v494, 4
    %v559 = vsel %vm143, %v558, %v492
    %v561 = vunpack.c.l.s4 1983009808
    %v562 = vunpack.c.0.s8 %v561
    %v563 = vperm.slane %v559, %v562
    %v564 = vsel %vm143, %v497, %v486
    %v566 = vunpack.c.l.s4 1983009808
    %v567 = vunpack.c.0.s8 %v566
    %v568 = vperm.slane %v564, %v567
    %v569 = vrot.slane %v498, 4
    %v570 = vsel %vm143, %v569, %v496
    %v572 = vunpack.c.l.s4 1983009808
    %v573 = vunpack.c.0.s8 %v572
    %v574 = vperm.slane %v570, %v573
    %v575 = vrot.slane %v563, 4
    %v576 = vsel %vm143, %v575, %v557
    %v577 = vrot.slane %v557, 4
    %v578 = vsel %vm143, %v563, %v577
    %v580 = vunpack.c.l.s4 1934713408
    %v581 = vunpack.c.0.s8 %v580
    %v582 = vperm.slane %v576, %v581
    %v584 = vunpack.c.l.s4 1934713408
    %v585 = vunpack.c.0.s8 %v584
    %v586 = vperm.slane %v578, %v585
    %v587 = vrot.slane %v574, 4
    %v588 = vsel %vm143, %v587, %v568
    %v589 = vrot.slane %v568, 4
    %v590 = vsel %vm143, %v574, %v589
    %v592 = vunpack.c.l.s4 1934713408
    %v593 = vunpack.c.0.s8 %v592
    %v594 = vperm.slane %v588, %v593
    %v596 = vunpack.c.l.s4 1934713408
    %v597 = vunpack.c.0.s8 %v596
    %v598 = vperm.slane %v590, %v597
    %v599 = vrot.slane %v594, 4
    %v600 = vsel %vm143, %v599, %v582
    %v601 = vrot.slane %v582, 4
    %v602 = vsel %vm143, %v594, %v601
    %v603 = vrot.slane %v598, 4
    %v604 = vsel %vm143, %v603, %v586
    %v605 = vrot.slane %v586, 4
    %v606 = vsel %vm143, %v598, %v605
    %607 = vrot.lane.b32.xlu0 %v117, 64
    %v608 = vpop.permute.xlu0 %607
    %609 = vrot.lane.b32.xlu0 %v120, 64
    %v610 = vpop.permute.xlu0 %609
    %611 = vrot.lane.b32.xlu0 %v125, 64
    %v612 = vpop.permute.xlu0 %611
    %613 = vrot.lane.b32.xlu0 %v127, 64
    %v614 = vpop.permute.xlu0 %613
    %615 = vrot.lane.b32.xlu0 %v131, 64
    %v616 = vpop.permute.xlu0 %615
    %617 = vrot.lane.b32.xlu0 %v133, 64
    %v618 = vpop.permute.xlu0 %617
    %619 = vrot.lane.b32.xlu0 %v137, 64
    %v620 = vpop.permute.xlu0 %619
    %621 = vrot.lane.b32.xlu0 %v139, 64
    %v622 = vpop.permute.xlu0 %621
    %v631 = vrot.slane %v616, 4
    %v632 = vsel %vm143, %v631, %v608
    %v633 = vrot.slane %v608, 4
    %v634 = vsel %vm143, %v616, %v633
    %v636 = vunpack.c.l.s4 1983009808
    %v637 = vunpack.c.0.s8 %v636
    %v638 = vperm.slane %v632, %v637
    %v640 = vunpack.c.l.s4 1983009808
    %v641 = vunpack.c.0.s8 %v640
    %v642 = vperm.slane %v634, %v641
    %v643 = vrot.slane %v620, 4
    %v644 = vsel %vm143, %v643, %v612
    %v645 = vrot.slane %v612, 4
    %v646 = vsel %vm143, %v620, %v645
    %v648 = vunpack.c.l.s4 1983009808
    %v649 = vunpack.c.0.s8 %v648
    %v650 = vperm.slane %v644, %v649
    %v652 = vunpack.c.l.s4 1983009808
    %v653 = vunpack.c.0.s8 %v652
    %v654 = vperm.slane %v646, %v653
    %v655 = vrot.slane %v650, 4
    %v656 = vsel %vm143, %v655, %v638
    %v657 = vrot.slane %v638, 4
    %v658 = vsel %vm143, %v650, %v657
    %v660 = vunpack.c.l.s4 1934713408
    %v661 = vunpack.c.0.s8 %v660
    %v662 = vperm.slane %v656, %v661
    %v664 = vunpack.c.l.s4 1934713408
    %v665 = vunpack.c.0.s8 %v664
    %v666 = vperm.slane %v658, %v665
    %v667 = vrot.slane %v654, 4
    %v668 = vsel %vm143, %v667, %v642
    %v669 = vrot.slane %v642, 4
    %v670 = vsel %vm143, %v654, %v669
    %v672 = vunpack.c.l.s4 1934713408
    %v673 = vunpack.c.0.s8 %v672
    %v674 = vperm.slane %v668, %v673
    %v676 = vunpack.c.l.s4 1934713408
    %v677 = vunpack.c.0.s8 %v676
    %v678 = vperm.slane %v670, %v677
    %v679 = vrot.slane %v662, 4
    %v680 = vsel %vm143, 0.0, %v679
    %v681 = vrot.slane %v666, 4
    %v682 = vsel %vm143, 0.0, %v681
    %v683 = vrot.slane %v674, 4
    %v684 = vsel %vm143, 0.0, %v683
    %v685 = vrot.slane %v678, 4
    %v686 = vsel %vm143, 0.0, %v685
    %v687 = vrot.slane %v618, 4
    %v688 = vsel %vm143, %v687, %v610
    %v689 = vrot.slane %v610, 4
    %v690 = vsel %vm143, %v618, %v689
    %v692 = vunpack.c.l.s4 1983009808
    %v693 = vunpack.c.0.s8 %v692
    %v694 = vperm.slane %v688, %v693
    %v696 = vunpack.c.l.s4 1983009808
    %v697 = vunpack.c.0.s8 %v696
    %v698 = vperm.slane %v690, %v697
    %v699 = vrot.slane %v622, 4
    %v700 = vsel %vm143, %v699, %v614
    %v701 = vrot.slane %v614, 4
    %v702 = vsel %vm143, %v622, %v701
    %v704 = vunpack.c.l.s4 1983009808
    %v705 = vunpack.c.0.s8 %v704
    %v706 = vperm.slane %v700, %v705
    %v708 = vunpack.c.l.s4 1983009808
    %v709 = vunpack.c.0.s8 %v708
    %v710 = vperm.slane %v702, %v709
    %v711 = vrot.slane %v706, 4
    %v712 = vsel %vm143, %v711, %v694
    %v713 = vrot.slane %v694, 4
    %v714 = vsel %vm143, %v706, %v713
    %v716 = vunpack.c.l.s4 1934713408
    %v717 = vunpack.c.0.s8 %v716
    %v718 = vperm.slane %v712, %v717
    %v720 = vunpack.c.l.s4 1934713408
    %v721 = vunpack.c.0.s8 %v720
    %v722 = vperm.slane %v714, %v721
    %v723 = vrot.slane %v710, 4
    %v724 = vsel %vm143, %v723, %v698
    %v725 = vrot.slane %v698, 4
    %v726 = vsel %vm143, %v710, %v725
    %v728 = vunpack.c.l.s4 1934713408
    %v729 = vunpack.c.0.s8 %v728
    %v730 = vperm.slane %v724, %v729
    %v732 = vunpack.c.l.s4 1934713408
    %v733 = vunpack.c.0.s8 %v732
    %v734 = vperm.slane %v726, %v733
    %v735 = vrot.slane %v718, 4
    %v736 = vsel %vm143, 0.0, %v735
    %v737 = vrot.slane %v722, 4
    %v738 = vsel %vm143, 0.0, %v737
    %v739 = vrot.slane %v730, 4
    %v740 = vsel %vm143, 0.0, %v739
    %v741 = vrot.slane %v734, 4
    %v742 = vsel %vm143, 0.0, %v741
    %v743 = vsel %vm143, %v681, %v662
    %v745 = vunpack.c.l.s4 1983009808
    %v746 = vunpack.c.0.s8 %v745
    %v747 = vperm.slane %v743, %v746
    %v748 = vrot.slane %v682, 4
    %v749 = vsel %vm143, %v748, %v680
    %v751 = vunpack.c.l.s4 1983009808
    %v752 = vunpack.c.0.s8 %v751
    %v753 = vperm.slane %v749, %v752
    %v754 = vsel %vm143, %v685, %v674
    %v756 = vunpack.c.l.s4 1983009808
    %v757 = vunpack.c.0.s8 %v756
    %v758 = vperm.slane %v754, %v757
    %v759 = vrot.slane %v686, 4
    %v760 = vsel %vm143, %v759, %v684
    %v762 = vunpack.c.l.s4 1983009808
    %v763 = vunpack.c.0.s8 %v762
    %v764 = vperm.slane %v760, %v763
    %v765 = vrot.slane %v753, 4
    %v766 = vsel %vm143, %v765, %v747
    %v767 = vrot.slane %v747, 4
    %v768 = vsel %vm143, %v753, %v767
    %v770 = vunpack.c.l.s4 1934713408
    %v771 = vunpack.c.0.s8 %v770
    %v772 = vperm.slane %v766, %v771
    %v774 = vunpack.c.l.s4 1934713408
    %v775 = vunpack.c.0.s8 %v774
    %v776 = vperm.slane %v768, %v775
    %v777 = vrot.slane %v764, 4
    %v778 = vsel %vm143, %v777, %v758
    %v779 = vrot.slane %v758, 4
    %v780 = vsel %vm143, %v764, %v779
    %v782 = vunpack.c.l.s4 1934713408
    %v783 = vunpack.c.0.s8 %v782
    %v784 = vperm.slane %v778, %v783
    %v786 = vunpack.c.l.s4 1934713408
    %v787 = vunpack.c.0.s8 %v786
    %v788 = vperm.slane %v780, %v787
    %v789 = vrot.slane %v784, 4
    %v790 = vsel %vm143, %v789, %v772
    %v791 = vrot.slane %v772, 4
    %v792 = vsel %vm143, %v784, %v791
    %v793 = vrot.slane %v788, 4
    %v794 = vsel %vm143, %v793, %v776
    %v795 = vrot.slane %v776, 4
    %v796 = vsel %vm143, %v788, %v795
    %v797 = vsel %vm143, %v737, %v718
    %v799 = vunpack.c.l.s4 1983009808
    %v800 = vunpack.c.0.s8 %v799
    %v801 = vperm.slane %v797, %v800
    %v802 = vrot.slane %v738, 4
    %v803 = vsel %vm143, %v802, %v736
    %v805 = vunpack.c.l.s4 1983009808
    %v806 = vunpack.c.0.s8 %v805
    %v807 = vperm.slane %v803, %v806
    %v808 = vsel %vm143, %v741, %v730
    %v810 = vunpack.c.l.s4 1983009808
    %v811 = vunpack.c.0.s8 %v810
    %v812 = vperm.slane %v808, %v811
    %v813 = vrot.slane %v742, 4
    %v814 = vsel %vm143, %v813, %v740
    %v816 = vunpack.c.l.s4 1983009808
    %v817 = vunpack.c.0.s8 %v816
    %v818 = vperm.slane %v814, %v817
    %v819 = vrot.slane %v807, 4
    %v820 = vsel %vm143, %v819, %v801
    %v821 = vrot.slane %v801, 4
    %v822 = vsel %vm143, %v807, %v821
    %v824 = vunpack.c.l.s4 1934713408
    %v825 = vunpack.c.0.s8 %v824
    %v826 = vperm.slane %v820, %v825
    %v828 = vunpack.c.l.s4 1934713408
    %v829 = vunpack.c.0.s8 %v828
    %v830 = vperm.slane %v822, %v829
    %v831 = vrot.slane %v818, 4
    %v832 = vsel %vm143, %v831, %v812
    %v833 = vrot.slane %v812, 4
    %v834 = vsel %vm143, %v818, %v833
    %v836 = vunpack.c.l.s4 1934713408
    %v837 = vunpack.c.0.s8 %v836
    %v838 = vperm.slane %v832, %v837
    %v840 = vunpack.c.l.s4 1934713408
    %v841 = vunpack.c.0.s8 %v840
    %v842 = vperm.slane %v834, %v841
    %v843 = vrot.slane %v838, 4
    %v844 = vsel %vm143, %v843, %v826
    %v845 = vrot.slane %v826, 4
    %v846 = vsel %vm143, %v838, %v845
    %v847 = vrot.slane %v842, 4
    %v848 = vsel %vm143, %v847, %v830
    %v849 = vrot.slane %v830, 4
    %v850 = vsel %vm143, %v842, %v849
    %v851 = vld [vmem:[%s6] sm:$0xff]
    %v852 = vld [vmem:[%s6 + $0x8] sm:$0xff]
    %vm853 = vcmask 64512
    %v855 = vsel %vm853, %v302, 0
    %v858 = vsel %vm853, %v356, 0
    %v861 = vsel %vm853, %v546, 0
    %v864 = vsel %vm853, %v600, 0
    %866 = vmatpush.xpose.msra.mxu0 0.0
    %867 = vmatpush.xpose.msra.mxu0 0.0
    %868 = vmatpush.xpose.msra.mxu0 0.0
    %869 = vmatpush.xpose.msra.mxu0 0.0
    %870 = vmatpush.xpose.msra.mxu0 0.0
    %871 = vmatpush.xpose.msra.mxu0 0.0
    %872 = vmatpush.xpose.msra.mxu0 0.0
    %873 = vmatpush.xpose.msra.mxu0 0.0
    %874 = vmatpush.xpose.msra.mxu0 0.0
    %875 = vmatpush.xpose.msra.mxu0 0.0
    %876 = vmatpush.xpose.msra.mxu0 0.0
    %877 = vmatpush.xpose.msra.mxu0 0.0
    %878 = vmatpush.xpose.msra.mxu0 0.0
    %879 = vmatpush.xpose.msra.mxu0 0.0
    %880 = vmatpush.xpose.msra.mxu0 %v864
    %881 = vmatpush.xpose.msra.mxu0 %v861
    %882 = vmatmul.f32.gmra.mxu0 %v855
    %v883 = vpop.f32.mrf.mxu0
    %v884 = vadd.f32 %v851, %v883
    %885 = vmatmul.f32.gmra.mxu0 %v858
    %v886 = vpop.f32.mrf.mxu0
    %v887 = vadd.f32 %v852, %v886
    %888 = vdwg.mxu0
    %v890 = vsel %vm853, %v304, 0
    %v893 = vsel %vm853, %v358, 0
    %v896 = vsel %vm853, %v548, 0
    %v899 = vsel %vm853, %v602, 0
    %901 = vmatpush.xpose.msra.mxu0 0.0
    %902 = vmatpush.xpose.msra.mxu0 0.0
    %903 = vmatpush.xpose.msra.mxu0 0.0
    %904 = vmatpush.xpose.msra.mxu0 0.0
    %905 = vmatpush.xpose.msra.mxu0 0.0
    %906 = vmatpush.xpose.msra.mxu0 0.0
    %907 = vmatpush.xpose.msra.mxu0 0.0
    %908 = vmatpush.xpose.msra.mxu0 0.0
    %909 = vmatpush.xpose.msra.mxu0 0.0
    %910 = vmatpush.xpose.msra.mxu0 0.0
    %911 = vmatpush.xpose.msra.mxu0 0.0
    %912 = vmatpush.xpose.msra.mxu0 0.0
    %913 = vmatpush.xpose.msra.mxu0 0.0
    %914 = vmatpush.xpose.msra.mxu0 0.0
    %915 = vmatpush.xpose.msra.mxu0 %v899
    %916 = vmatpush.xpose.msra.mxu0 %v896
    %917 = vmatmul.f32.gmra.mxu0 %v890
    %v918 = vpop.f32.mrf.mxu0
    %v919 = vadd.f32 %v851, %v918
    %920 = vmatmul.f32.gmra.mxu0 %v893
    %v921 = vpop.f32.mrf.mxu0
    %v922 = vadd.f32 %v852, %v921
    %923 = vdwg.mxu0
    %v925 = vsel %vm853, %v306, 0
    %v928 = vsel %vm853, %v360, 0
    %v931 = vsel %vm853, %v550, 0
    %v934 = vsel %vm853, %v604, 0
    %936 = vmatpush.xpose.msra.mxu0 0.0
    %937 = vmatpush.xpose.msra.mxu0 0.0
    %938 = vmatpush.xpose.msra.mxu0 0.0
    %939 = vmatpush.xpose.msra.mxu0 0.0
    %940 = vmatpush.xpose.msra.mxu0 0.0
    %941 = vmatpush.xpose.msra.mxu0 0.0
    %942 = vmatpush.xpose.msra.mxu0 0.0
    %943 = vmatpush.xpose.msra.mxu0 0.0
    %944 = vmatpush.xpose.msra.mxu0 0.0
    %945 = vmatpush.xpose.msra.mxu0 0.0
    %946 = vmatpush.xpose.msra.mxu0 0.0
    %947 = vmatpush.xpose.msra.mxu0 0.0
    %948 = vmatpush.xpose.msra.mxu0 0.0
    %949 = vmatpush.xpose.msra.mxu0 0.0
    %950 = vmatpush.xpose.msra.mxu0 %v934
    %951 = vmatpush.xpose.msra.mxu0 %v931
    %952 = vmatmul.f32.gmra.mxu0 %v925
    %v953 = vpop.f32.mrf.mxu0
    %v954 = vadd.f32 %v851, %v953
    %955 = vmatmul.f32.gmra.mxu0 %v928
    %v956 = vpop.f32.mrf.mxu0
    %v957 = vadd.f32 %v852, %v956
    %958 = vdwg.mxu0
    %v960 = vsel %vm853, %v308, 0
    %v963 = vsel %vm853, %v362, 0
    %v966 = vsel %vm853, %v552, 0
    %v969 = vsel %vm853, %v606, 0
    %971 = vmatpush.xpose.msra.mxu0 0.0
    %972 = vmatpush.xpose.msra.mxu0 0.0
    %973 = vmatpush.xpose.msra.mxu0 0.0
    %974 = vmatpush.xpose.msra.mxu0 0.0
    %975 = vmatpush.xpose.msra.mxu0 0.0
    %976 = vmatpush.xpose.msra.mxu0 0.0
    %977 = vmatpush.xpose.msra.mxu0 0.0
    %978 = vmatpush.xpose.msra.mxu0 0.0
    %979 = vmatpush.xpose.msra.mxu0 0.0
    %980 = vmatpush.xpose.msra.mxu0 0.0
    %981 = vmatpush.xpose.msra.mxu0 0.0
    %982 = vmatpush.xpose.msra.mxu0 0.0
    %983 = vmatpush.xpose.msra.mxu0 0.0
    %984 = vmatpush.xpose.msra.mxu0 0.0
    %985 = vmatpush.xpose.msra.mxu0 %v969
    %986 = vmatpush.xpose.msra.mxu0 %v966
    %987 = vmatmul.f32.gmra.mxu0 %v960
    %v988 = vpop.f32.mrf.mxu0
    %v989 = vadd.f32 %v851, %v988
    %990 = vmatmul.f32.gmra.mxu0 %v963
    %v991 = vpop.f32.mrf.mxu0
    %v992 = vadd.f32 %v852, %v991
    %993 = vdwg.mxu0
    %vm994 = vcmask 130048
    %v995 = vsel %vm994, %v884, -inf
    %996 = vmax.xlane.f32.xlu0 %v995
    %v997 = vpop.xlane.xlu0 %996
    %v998 = vsel %vm994, %v887, -inf
    %999 = vmax.xlane.f32.xlu0 %v998
    %v1000 = vpop.xlane.xlu0 %999
    %v1001 = vsel %vm994, %v919, -inf
    %1002 = vmax.xlane.f32.xlu0 %v1001
    %v1003 = vpop.xlane.xlu0 %1002
    %v1004 = vsel %vm994, %v922, -inf
    %1005 = vmax.xlane.f32.xlu0 %v1004
    %v1006 = vpop.xlane.xlu0 %1005
    %v1007 = vsel %vm994, %v954, -inf
    %1008 = vmax.xlane.f32.xlu0 %v1007
    %v1009 = vpop.xlane.xlu0 %1008
    %v1010 = vsel %vm994, %v957, -inf
    %1011 = vmax.xlane.f32.xlu0 %v1010
    %v1012 = vpop.xlane.xlu0 %1011
    %v1013 = vsel %vm994, %v989, -inf
    %1014 = vmax.xlane.f32.xlu0 %v1013
    %v1015 = vpop.xlane.xlu0 %1014
    %v1016 = vsel %vm994, %v992, -inf
    %1017 = vmax.xlane.f32.xlu0 %v1016
    %v1018 = vpop.xlane.xlu0 %1017
    %v1019 = vsub.f32 %v884, %v997
    %v1020 = vsub.f32 %v887, %v1000
    %v1021 = vsub.f32 %v919, %v1003
    %v1022 = vsub.f32 %v922, %v1006
    %v1023 = vsub.f32 %v954, %v1009
    %v1024 = vsub.f32 %v957, %v1012
    %v1025 = vsub.f32 %v989, %v1015
    %v1026 = vsub.f32 %v992, %v1018
    %v1027 = vmul.f32 %v1019, 1.442695
    %v1028 = vpow.pop %v1027
    %v1029 = vmul.f32 %v1020, 1.442695
    %v1030 = vpow.pop %v1029
    %v1031 = vmul.f32 %v1021, 1.442695
    %v1032 = vpow.pop %v1031
    %v1033 = vmul.f32 %v1022, 1.442695
    %v1034 = vpow.pop %v1033
    %v1035 = vmul.f32 %v1023, 1.442695
    %v1036 = vpow.pop %v1035
    %v1037 = vmul.f32 %v1024, 1.442695
    %v1038 = vpow.pop %v1037
    %v1039 = vmul.f32 %v1025, 1.442695
    %v1040 = vpow.pop %v1039
    %v1041 = vmul.f32 %v1026, 1.442695
    %v1042 = vpow.pop %v1041
    %v1043 = vsel %vm994, %v1028, 0.0
    %1044 = vadd.xlane.f32.xlu0 %v1043
    %v1045 = vpop.xlane.xlu0 %1044
    %v1046 = vsel %vm994, %v1030, 0.0
    %1047 = vadd.xlane.f32.xlu0 %v1046
    %v1048 = vpop.xlane.xlu0 %1047
    %v1049 = vsel %vm994, %v1032, 0.0
    %1050 = vadd.xlane.f32.xlu0 %v1049
    %v1051 = vpop.xlane.xlu0 %1050
    %v1052 = vsel %vm994, %v1034, 0.0
    %1053 = vadd.xlane.f32.xlu0 %v1052
    %v1054 = vpop.xlane.xlu0 %1053
    %v1055 = vsel %vm994, %v1036, 0.0
    %1056 = vadd.xlane.f32.xlu0 %v1055
    %v1057 = vpop.xlane.xlu0 %1056
    %v1058 = vsel %vm994, %v1038, 0.0
    %1059 = vadd.xlane.f32.xlu0 %v1058
    %v1060 = vpop.xlane.xlu0 %1059
    %v1061 = vsel %vm994, %v1040, 0.0
    %1062 = vadd.xlane.f32.xlu0 %v1061
    %v1063 = vpop.xlane.xlu0 %1062
    %v1064 = vsel %vm994, %v1042, 0.0
    %1065 = vadd.xlane.f32.xlu0 %v1064
    %v1066 = vpop.xlane.xlu0 %1065
    %v1068 = vsel %vm994, %v1028, 0
    %v1071 = vsel %vm994, %v1030, 0
    %1073 = vmatpush.msra.mxu0 0.0
    %1074 = vmatpush.msra.mxu0 0.0
    %1075 = vmatpush.msra.mxu0 0.0
    %1076 = vmatpush.msra.mxu0 0.0
    %1077 = vmatpush.msra.mxu0 0.0
    %1078 = vmatpush.msra.mxu0 0.0
    %1079 = vmatpush.msra.mxu0 0.0
    %1080 = vmatpush.msra.mxu0 0.0
    %1081 = vmatpush.msra.mxu0 0.0
    %1082 = vmatpush.msra.mxu0 0.0
    %1083 = vmatpush.msra.mxu0 0.0
    %1084 = vmatpush.msra.mxu0 0.0
    %1085 = vmatpush.msra.mxu0 0.0
    %1086 = vmatpush.msra.mxu0 0.0
    %1087 = vmatpush.msra.mxu0 %v844
    %1088 = vmatpush.msra.mxu0 %v790
    %1089 = vmatmul.f32.gmra.mxu0 %v1068
    %v1090 = vpop.f32.mrf.mxu0
    %v1091 = vadd.f32 0.0, %v1090
    %1092 = vmatmul.f32.gmra.mxu0 %v1071
    %v1093 = vpop.f32.mrf.mxu0
    %v1094 = vadd.f32 0.0, %v1093
    %1095 = vdwg.mxu0
    %v1097 = vsel %vm994, %v1032, 0
    %v1100 = vsel %vm994, %v1034, 0
    %1102 = vmatpush.msra.mxu0 0.0
    %1103 = vmatpush.msra.mxu0 0.0
    %1104 = vmatpush.msra.mxu0 0.0
    %1105 = vmatpush.msra.mxu0 0.0
    %1106 = vmatpush.msra.mxu0 0.0
    %1107 = vmatpush.msra.mxu0 0.0
    %1108 = vmatpush.msra.mxu0 0.0
    %1109 = vmatpush.msra.mxu0 0.0
    %1110 = vmatpush.msra.mxu0 0.0
    %1111 = vmatpush.msra.mxu0 0.0
    %1112 = vmatpush.msra.mxu0 0.0
    %1113 = vmatpush.msra.mxu0 0.0
    %1114 = vmatpush.msra.mxu0 0.0
    %1115 = vmatpush.msra.mxu0 0.0
    %1116 = vmatpush.msra.mxu0 %v846
    %1117 = vmatpush.msra.mxu0 %v792
    %1118 = vmatmul.f32.gmra.mxu0 %v1097
    %v1119 = vpop.f32.mrf.mxu0
    %v1120 = vadd.f32 0.0, %v1119
    %1121 = vmatmul.f32.gmra.mxu0 %v1100
    %v1122 = vpop.f32.mrf.mxu0
    %v1123 = vadd.f32 0.0, %v1122
    %1124 = vdwg.mxu0
    %v1126 = vsel %vm994, %v1036, 0
    %v1129 = vsel %vm994, %v1038, 0
    %1131 = vmatpush.msra.mxu0 0.0
    %1132 = vmatpush.msra.mxu0 0.0
    %1133 = vmatpush.msra.mxu0 0.0
    %1134 = vmatpush.msra.mxu0 0.0
    %1135 = vmatpush.msra.mxu0 0.0
    %1136 = vmatpush.msra.mxu0 0.0
    %1137 = vmatpush.msra.mxu0 0.0
    %1138 = vmatpush.msra.mxu0 0.0
    %1139 = vmatpush.msra.mxu0 0.0
    %1140 = vmatpush.msra.mxu0 0.0
    %1141 = vmatpush.msra.mxu0 0.0
    %1142 = vmatpush.msra.mxu0 0.0
    %1143 = vmatpush.msra.mxu0 0.0
    %1144 = vmatpush.msra.mxu0 0.0
    %1145 = vmatpush.msra.mxu0 %v848
    %1146 = vmatpush.msra.mxu0 %v794
    %1147 = vmatmul.f32.gmra.mxu0 %v1126
    %v1148 = vpop.f32.mrf.mxu0
    %v1149 = vadd.f32 0.0, %v1148
    %1150 = vmatmul.f32.gmra.mxu0 %v1129
    %v1151 = vpop.f32.mrf.mxu0
    %v1152 = vadd.f32 0.0, %v1151
    %1153 = vdwg.mxu0
    %v1155 = vsel %vm994, %v1040, 0
    %v1158 = vsel %vm994, %v1042, 0
    %1160 = vmatpush.msra.mxu0 0.0
    %1161 = vmatpush.msra.mxu0 0.0
    %1162 = vmatpush.msra.mxu0 0.0
    %1163 = vmatpush.msra.mxu0 0.0
    %1164 = vmatpush.msra.mxu0 0.0
    %1165 = vmatpush.msra.mxu0 0.0
    %1166 = vmatpush.msra.mxu0 0.0
    %1167 = vmatpush.msra.mxu0 0.0
    %1168 = vmatpush.msra.mxu0 0.0
    %1169 = vmatpush.msra.mxu0 0.0
    %1170 = vmatpush.msra.mxu0 0.0
    %1171 = vmatpush.msra.mxu0 0.0
    %1172 = vmatpush.msra.mxu0 0.0
    %1173 = vmatpush.msra.mxu0 0.0
    %1174 = vmatpush.msra.mxu0 %v850
    %1175 = vmatpush.msra.mxu0 %v796
    %1176 = vmatmul.f32.gmra.mxu0 %v1155
    %v1177 = vpop.f32.mrf.mxu0
    %v1178 = vadd.f32 0.0, %v1177
    %1179 = vmatmul.f32.gmra.mxu0 %v1158
    %v1180 = vpop.f32.mrf.mxu0
    %v1181 = vadd.f32 0.0, %v1180
    %1182 = vdwg.mxu0
    %v1183 = vrcp.pop %v1045
    %v1184 = vmul.f32 %v1045, %v1183
    %v1185 = vsub.f32 1.0, %v1184
    %v1186 = vmul.f32 %v1183, %v1185
    %v1187 = vadd.f32 %v1183, %v1186
    %vm1188 = vweird.f32 %v1045
    %vm1189 = vweird.f32 %v1183
    %vm1190 = vmor %vm1188, %vm1189
    %v1191 = vsel %vm1190, %v1183, %v1187
    %v1192 = vand.u32 2147483647, %v1045
    %vm1193 = vcmp.eq.f32.partialorder %v1192, 8.507059e+37
    %v1194 = vand.u32 %v1045, 2147483648
    %v1195 = vor.u32 1.1754944e-38, %v1194
    %v1196 = vsel %vm1193, %v1195, %v1191
    %v1197 = vmul.f32 1.0, %v1196
    %v1198 = vrcp.pop %v1048
    %v1199 = vmul.f32 %v1048, %v1198
    %v1200 = vsub.f32 1.0, %v1199
    %v1201 = vmul.f32 %v1198, %v1200
    %v1202 = vadd.f32 %v1198, %v1201
    %vm1203 = vweird.f32 %v1048
    %vm1204 = vweird.f32 %v1198
    %vm1205 = vmor %vm1203, %vm1204
    %v1206 = vsel %vm1205, %v1198, %v1202
    %v1207 = vand.u32 2147483647, %v1048
    %vm1208 = vcmp.eq.f32.partialorder %v1207, 8.507059e+37
    %v1209 = vand.u32 %v1048, 2147483648
    %v1210 = vor.u32 1.1754944e-38, %v1209
    %v1211 = vsel %vm1208, %v1210, %v1206
    %v1212 = vmul.f32 1.0, %v1211
    %v1213 = vrcp.pop %v1051
    %v1214 = vmul.f32 %v1051, %v1213
    %v1215 = vsub.f32 1.0, %v1214
    %v1216 = vmul.f32 %v1213, %v1215
    %v1217 = vadd.f32 %v1213, %v1216
    %vm1218 = vweird.f32 %v1051
    %vm1219 = vweird.f32 %v1213
    %vm1220 = vmor %vm1218, %vm1219
    %v1221 = vsel %vm1220, %v1213, %v1217
    %v1222 = vand.u32 2147483647, %v1051
    %vm1223 = vcmp.eq.f32.partialorder %v1222, 8.507059e+37
    %v1224 = vand.u32 %v1051, 2147483648
    %v1225 = vor.u32 1.1754944e-38, %v1224
    %v1226 = vsel %vm1223, %v1225, %v1221
    %v1227 = vmul.f32 1.0, %v1226
    %v1228 = vrcp.pop %v1054
    %v1229 = vmul.f32 %v1054, %v1228
    %v1230 = vsub.f32 1.0, %v1229
    %v1231 = vmul.f32 %v1228, %v1230
    %v1232 = vadd.f32 %v1228, %v1231
    %vm1233 = vweird.f32 %v1054
    %vm1234 = vweird.f32 %v1228
    %vm1235 = vmor %vm1233, %vm1234
    %v1236 = vsel %vm1235, %v1228, %v1232
    %v1237 = vand.u32 2147483647, %v1054
    %vm1238 = vcmp.eq.f32.partialorder %v1237, 8.507059e+37
    %v1239 = vand.u32 %v1054, 2147483648
    %v1240 = vor.u32 1.1754944e-38, %v1239
    %v1241 = vsel %vm1238, %v1240, %v1236
    %v1242 = vmul.f32 1.0, %v1241
    %v1243 = vrcp.pop %v1057
    %v1244 = vmul.f32 %v1057, %v1243
    %v1245 = vsub.f32 1.0, %v1244
    %v1246 = vmul.f32 %v1243, %v1245
    %v1247 = vadd.f32 %v1243, %v1246
    %vm1248 = vweird.f32 %v1057
    %vm1249 = vweird.f32 %v1243
    %vm1250 = vmor %vm1248, %vm1249
    %v1251 = vsel %vm1250, %v1243, %v1247
    %v1252 = vand.u32 2147483647, %v1057
    %vm1253 = vcmp.eq.f32.partialorder %v1252, 8.507059e+37
    %v1254 = vand.u32 %v1057, 2147483648
    %v1255 = vor.u32 1.1754944e-38, %v1254
    %v1256 = vsel %vm1253, %v1255, %v1251
    %v1257 = vmul.f32 1.0, %v1256
    %v1258 = vrcp.pop %v1060
    %v1259 = vmul.f32 %v1060, %v1258
    %v1260 = vsub.f32 1.0, %v1259
    %v1261 = vmul.f32 %v1258, %v1260
    %v1262 = vadd.f32 %v1258, %v1261
    %vm1263 = vweird.f32 %v1060
    %vm1264 = vweird.f32 %v1258
    %vm1265 = vmor %vm1263, %vm1264
    %v1266 = vsel %vm1265, %v1258, %v1262
    %v1267 = vand.u32 2147483647, %v1060
    %vm1268 = vcmp.eq.f32.partialorder %v1267, 8.507059e+37
    %v1269 = vand.u32 %v1060, 2147483648
    %v1270 = vor.u32 1.1754944e-38, %v1269
    %v1271 = vsel %vm1268, %v1270, %v1266
    %v1272 = vmul.f32 1.0, %v1271
    %v1273 = vrcp.pop %v1063
    %v1274 = vmul.f32 %v1063, %v1273
    %v1275 = vsub.f32 1.0, %v1274
    %v1276 = vmul.f32 %v1273, %v1275
    %v1277 = vadd.f32 %v1273, %v1276
    %vm1278 = vweird.f32 %v1063
    %vm1279 = vweird.f32 %v1273
    %vm1280 = vmor %vm1278, %vm1279
    %v1281 = vsel %vm1280, %v1273, %v1277
    %v1282 = vand.u32 2147483647, %v1063
    %vm1283 = vcmp.eq.f32.partialorder %v1282, 8.507059e+37
    %v1284 = vand.u32 %v1063, 2147483648
    %v1285 = vor.u32 1.1754944e-38, %v1284
    %v1286 = vsel %vm1283, %v1285, %v1281
    %v1287 = vmul.f32 1.0, %v1286
    %v1288 = vrcp.pop %v1066
    %v1289 = vmul.f32 %v1066, %v1288
    %v1290 = vsub.f32 1.0, %v1289
    %v1291 = vmul.f32 %v1288, %v1290
    %v1292 = vadd.f32 %v1288, %v1291
    %vm1293 = vweird.f32 %v1066
    %vm1294 = vweird.f32 %v1288
    %vm1295 = vmor %vm1293, %vm1294
    %v1296 = vsel %vm1295, %v1288, %v1292
    %v1297 = vand.u32 2147483647, %v1066
    %vm1298 = vcmp.eq.f32.partialorder %v1297, 8.507059e+37
    %v1299 = vand.u32 %v1066, 2147483648
    %v1300 = vor.u32 1.1754944e-38, %v1299
    %v1301 = vsel %vm1298, %v1300, %v1296
    %v1302 = vmul.f32 1.0, %v1301
    %v1303 = vmul.f32 %v1091, %v1197
    %v1304 = vmul.f32 %v1094, %v1212
    %v1305 = vmul.f32 %v1120, %v1227
    %v1306 = vmul.f32 %v1123, %v1242
    %v1307 = vmul.f32 %v1149, %v1257
    %v1308 = vmul.f32 %v1152, %v1272
    %v1309 = vmul.f32 %v1178, %v1287
    %v1310 = vmul.f32 %v1181, %v1302
    %v1311 = vrot.slane %v1307, 4
    %v1312 = vsel %vm143, %v1311, %v1303
    %v1313 = vrot.slane %v1303, 4
    %v1314 = vsel %vm143, %v1307, %v1313
    %v1316 = vunpack.c.l.s4 1983009808
    %v1317 = vunpack.c.0.s8 %v1316
    %v1318 = vperm.slane %v1312, %v1317
    %v1320 = vunpack.c.l.s4 1983009808
    %v1321 = vunpack.c.0.s8 %v1320
    %v1322 = vperm.slane %v1314, %v1321
    %v1323 = vrot.slane %v1309, 4
    %v1324 = vsel %vm143, %v1323, %v1305
    %v1325 = vrot.slane %v1305, 4
    %v1326 = vsel %vm143, %v1309, %v1325
    %v1328 = vunpack.c.l.s4 1983009808
    %v1329 = vunpack.c.0.s8 %v1328
    %v1330 = vperm.slane %v1324, %v1329
    %v1332 = vunpack.c.l.s4 1983009808
    %v1333 = vunpack.c.0.s8 %v1332
    %v1334 = vperm.slane %v1326, %v1333
    %v1335 = vrot.slane %v1330, 4
    %v1336 = vsel %vm143, %v1335, %v1318
    %v1337 = vrot.slane %v1318, 4
    %v1338 = vsel %vm143, %v1330, %v1337
    %v1340 = vunpack.c.l.s4 1934713408
    %v1341 = vunpack.c.0.s8 %v1340
    %v1342 = vperm.slane %v1336, %v1341
    %v1344 = vunpack.c.l.s4 1934713408
    %v1345 = vunpack.c.0.s8 %v1344
    %v1346 = vperm.slane %v1338, %v1345
    %v1347 = vrot.slane %v1334, 4
    %v1348 = vsel %vm143, %v1347, %v1322
    %v1349 = vrot.slane %v1322, 4
    %v1350 = vsel %vm143, %v1334, %v1349
    %v1352 = vunpack.c.l.s4 1934713408
    %v1353 = vunpack.c.0.s8 %v1352
    %v1354 = vperm.slane %v1348, %v1353
    %v1356 = vunpack.c.l.s4 1934713408
    %v1357 = vunpack.c.0.s8 %v1356
    %v1358 = vperm.slane %v1350, %v1357
    %v1359 = vrot.slane %v1342, 4
    %v1360 = vsel %vm143, 0.0, %v1359
    %v1361 = vrot.slane %v1346, 4
    %v1362 = vsel %vm143, 0.0, %v1361
    %v1363 = vrot.slane %v1354, 4
    %v1364 = vsel %vm143, 0.0, %v1363
    %v1365 = vrot.slane %v1358, 4
    %v1366 = vsel %vm143, 0.0, %v1365
    %v1367 = vrot.slane %v1308, 4
    %v1368 = vsel %vm143, %v1367, %v1304
    %v1369 = vrot.slane %v1304, 4
    %v1370 = vsel %vm143, %v1308, %v1369
    %v1372 = vunpack.c.l.s4 1983009808
    %v1373 = vunpack.c.0.s8 %v1372
    %v1374 = vperm.slane %v1368, %v1373
    %v1376 = vunpack.c.l.s4 1983009808
    %v1377 = vunpack.c.0.s8 %v1376
    %v1378 = vperm.slane %v1370, %v1377
    %v1379 = vrot.slane %v1310, 4
    %v1380 = vsel %vm143, %v1379, %v1306
    %v1381 = vrot.slane %v1306, 4
    %v1382 = vsel %vm143, %v1310, %v1381
    %v1384 = vunpack.c.l.s4 1983009808
    %v1385 = vunpack.c.0.s8 %v1384
    %v1386 = vperm.slane %v1380, %v1385
    %v1388 = vunpack.c.l.s4 1983009808
    %v1389 = vunpack.c.0.s8 %v1388
    %v1390 = vperm.slane %v1382, %v1389
    %v1391 = vrot.slane %v1386, 4
    %v1392 = vsel %vm143, %v1391, %v1374
    %v1393 = vrot.slane %v1374, 4
    %v1394 = vsel %vm143, %v1386, %v1393
    %v1396 = vunpack.c.l.s4 1934713408
    %v1397 = vunpack.c.0.s8 %v1396
    %v1398 = vperm.slane %v1392, %v1397
    %v1400 = vunpack.c.l.s4 1934713408
    %v1401 = vunpack.c.0.s8 %v1400
    %v1402 = vperm.slane %v1394, %v1401
    %v1403 = vrot.slane %v1390, 4
    %v1404 = vsel %vm143, %v1403, %v1378
    %v1405 = vrot.slane %v1378, 4
    %v1406 = vsel %vm143, %v1390, %v1405
    %v1408 = vunpack.c.l.s4 1934713408
    %v1409 = vunpack.c.0.s8 %v1408
    %v1410 = vperm.slane %v1404, %v1409
    %v1412 = vunpack.c.l.s4 1934713408
    %v1413 = vunpack.c.0.s8 %v1412
    %v1414 = vperm.slane %v1406, %v1413
    %v1415 = vrot.slane %v1398, 4
    %v1416 = vsel %vm143, 0.0, %v1415
    %v1417 = vrot.slane %v1402, 4
    %v1418 = vsel %vm143, 0.0, %v1417
    %v1419 = vrot.slane %v1410, 4
    %v1420 = vsel %vm143, 0.0, %v1419
    %v1421 = vrot.slane %v1414, 4
    %v1422 = vsel %vm143, 0.0, %v1421
    %v1423 = vsel %vm143, %v1361, %v1342
    %v1425 = vunpack.c.l.s4 1983009808
    %v1426 = vunpack.c.0.s8 %v1425
    %v1427 = vperm.slane %v1423, %v1426
    %v1428 = vrot.slane %v1362, 4
    %v1429 = vsel %vm143, %v1428, %v1360
    %v1431 = vunpack.c.l.s4 1983009808
    %v1432 = vunpack.c.0.s8 %v1431
    %v1433 = vperm.slane %v1429, %v1432
    %v1434 = vsel %vm143, %v1365, %v1354
    %v1436 = vunpack.c.l.s4 1983009808
    %v1437 = vunpack.c.0.s8 %v1436
    %v1438 = vperm.slane %v1434, %v1437
    %v1439 = vrot.slane %v1366, 4
    %v1440 = vsel %vm143, %v1439, %v1364
    %v1442 = vunpack.c.l.s4 1983009808
    %v1443 = vunpack.c.0.s8 %v1442
    %v1444 = vperm.slane %v1440, %v1443
    %v1445 = vrot.slane %v1433, 4
    %v1446 = vsel %vm143, %v1445, %v1427
    %v1447 = vrot.slane %v1427, 4
    %v1448 = vsel %vm143, %v1433, %v1447
    %v1450 = vunpack.c.l.s4 1934713408
    %v1451 = vunpack.c.0.s8 %v1450
    %v1452 = vperm.slane %v1446, %v1451
    %v1454 = vunpack.c.l.s4 1934713408
    %v1455 = vunpack.c.0.s8 %v1454
    %v1456 = vperm.slane %v1448, %v1455
    %v1457 = vrot.slane %v1444, 4
    %v1458 = vsel %vm143, %v1457, %v1438
    %v1459 = vrot.slane %v1438, 4
    %v1460 = vsel %vm143, %v1444, %v1459
    %v1462 = vunpack.c.l.s4 1934713408
    %v1463 = vunpack.c.0.s8 %v1462
    %v1464 = vperm.slane %v1458, %v1463
    %v1466 = vunpack.c.l.s4 1934713408
    %v1467 = vunpack.c.0.s8 %v1466
    %v1468 = vperm.slane %v1460, %v1467
    %v1469 = vrot.slane %v1464, 4
    %v1470 = vsel %vm143, %v1469, %v1452
    %v1471 = vrot.slane %v1452, 4
    %v1472 = vsel %vm143, %v1464, %v1471
    %v1473 = vrot.slane %v1468, 4
    %v1474 = vsel %vm143, %v1473, %v1456
    %v1475 = vrot.slane %v1456, 4
    %v1476 = vsel %vm143, %v1468, %v1475
    %v1477 = vsel %vm143, %v1417, %v1398
    %v1479 = vunpack.c.l.s4 1983009808
    %v1480 = vunpack.c.0.s8 %v1479
    %v1481 = vperm.slane %v1477, %v1480
    %v1482 = vrot.slane %v1418, 4
    %v1483 = vsel %vm143, %v1482, %v1416
    %v1485 = vunpack.c.l.s4 1983009808
    %v1486 = vunpack.c.0.s8 %v1485
    %v1487 = vperm.slane %v1483, %v1486
    %v1488 = vsel %vm143, %v1421, %v1410
    %v1490 = vunpack.c.l.s4 1983009808
    %v1491 = vunpack.c.0.s8 %v1490
    %v1492 = vperm.slane %v1488, %v1491
    %v1493 = vrot.slane %v1422, 4
    %v1494 = vsel %vm143, %v1493, %v1420
    %v1496 = vunpack.c.l.s4 1983009808
    %v1497 = vunpack.c.0.s8 %v1496
    %v1498 = vperm.slane %v1494, %v1497
    %v1499 = vrot.slane %v1487, 4
    %v1500 = vsel %vm143, %v1499, %v1481
    %v1501 = vrot.slane %v1481, 4
    %v1502 = vsel %vm143, %v1487, %v1501
    %v1504 = vunpack.c.l.s4 1934713408
    %v1505 = vunpack.c.0.s8 %v1504
    %v1506 = vperm.slane %v1500, %v1505
    %v1508 = vunpack.c.l.s4 1934713408
    %v1509 = vunpack.c.0.s8 %v1508
    %v1510 = vperm.slane %v1502, %v1509
    %v1511 = vrot.slane %v1498, 4
    %v1512 = vsel %vm143, %v1511, %v1492
    %v1513 = vrot.slane %v1492, 4
    %v1514 = vsel %vm143, %v1498, %v1513
    %v1516 = vunpack.c.l.s4 1934713408
    %v1517 = vunpack.c.0.s8 %v1516
    %v1518 = vperm.slane %v1512, %v1517
    %v1520 = vunpack.c.l.s4 1934713408
    %v1521 = vunpack.c.0.s8 %v1520
    %v1522 = vperm.slane %v1514, %v1521
    %v1523 = vrot.slane %v1518, 4
    %v1524 = vsel %vm143, %v1523, %v1506
    %v1525 = vrot.slane %v1506, 4
    %v1526 = vsel %vm143, %v1518, %v1525
    %v1527 = vrot.slane %v1522, 4
    %v1528 = vsel %vm143, %v1527, %v1510
    %v1529 = vrot.slane %v1510, 4
    %v1530 = vsel %vm143, %v1522, %v1529
    %1533 = vrot.lane.b32.xlu0 %v1472, 8
    %v1534 = vpop.permute.xlu0 %1533
    %1535 = vrot.lane.b32.xlu0 %v1526, 8
    %v1536 = vpop.permute.xlu0 %1535
    %1541 = vrot.lane.b32.xlu0 %v1474, 16
    %v1542 = vpop.permute.xlu0 %1541
    %1543 = vrot.lane.b32.xlu0 %v1528, 16
    %v1544 = vpop.permute.xlu0 %1543
    %1549 = vrot.lane.b32.xlu0 %v1476, 24
    %v1550 = vpop.permute.xlu0 %1549
    %1551 = vrot.lane.b32.xlu0 %v1530, 24
    %v1552 = vpop.permute.xlu0 %1551
    %v1555 = vsel %vm853, %v1470, %v1534
    %v1556 = vsel %vm853, %v1524, %v1536
    %v1557 = vsel %vm994, %v1555, %v1542
    %v1558 = vsel %vm994, %v1556, %v1544
    %vm1559 = vcmask 195584
    %v1560 = vsel %vm1559, %v1557, %v1550
    %v1561 = vsel %vm1559, %v1558, %v1552
    %v1562 = vld [vmem:[%s2] sm:$0xff]
    %v1563 = vld [vmem:[%s2 + $0x8] sm:$0xff]
    %v1564 = vld [vmem:[%s2 + $0x10] sm:$0xff]
    %v1565 = vld [vmem:[%s2 + $0x18] sm:$0xff]
    %v1566 = vperm.slane %v29, 4
    %v1568 = vsel %vm30, %v1560, 0
    %v1571 = vsel %vm30, %v1561, 0
    %1573 = vmatpush.msra.mxu0 0.0
    %1574 = vmatpush.msra.mxu0 0.0
    %1575 = vmatpush.msra.mxu0 0.0
    %1576 = vmatpush.msra.mxu0 0.0
    %1577 = vmatpush.msra.mxu0 0.0
    %1578 = vmatpush.msra.mxu0 0.0
    %1579 = vmatpush.msra.mxu0 0.0
    %1580 = vmatpush.msra.mxu0 0.0
    %1581 = vmatpush.msra.mxu0 0.0
    %1582 = vmatpush.msra.mxu0 0.0
    %1583 = vmatpush.msra.mxu0 0.0
    %1584 = vmatpush.msra.mxu0 0.0
    %1585 = vmatpush.msra.mxu0 %v1565
    %1586 = vmatpush.msra.mxu0 %v1564
    %1587 = vmatpush.msra.mxu0 %v1563
    %1588 = vmatpush.msra.mxu0 %v1562
    %1589 = vmatmul.f32.gmra.mxu0 %v1568
    %v1590 = vpop.f32.mrf.mxu0
    %v1591 = vadd.f32 %v1566, %v1590
    %1592 = vmatmul.f32.gmra.mxu0 %v1571
    %v1593 = vpop.f32.mrf.mxu0
    %v1594 = vadd.f32 %v1566, %v1593
    %1595 = vdwg.mxu0
    %v1596 = vadd.f32 %v27, %v1591
    %v1597 = vadd.f32 %v28, %v1594
    %v1598 = vsel %vm30, %v1596, 0.0
    %1599 = vadd.xlane.f32.xlu0 %v1598
    %v1600 = vpop.xlane.xlu0 %1599
    %v1601 = vsel %vm30, %v1597, 0.0
    %1602 = vadd.xlane.f32.xlu0 %v1601
    %v1603 = vpop.xlane.xlu0 %1602
    %v1604 = vmul.f32 %v1600, %v43
    %v1605 = vmul.f32 %v1603, %v43
    %v1606 = vsub.f32 %v1596, %v1604
    %v1607 = vsub.f32 %v1597, %v1605
    %v1608 = vmul.f32 %v1606, %v1606
    %v1609 = vmul.f32 %v1607, %v1607
    %v1610 = vsel %vm30, %v1608, 0.0
    %1611 = vadd.xlane.f32.xlu0 %v1610
    %v1612 = vpop.xlane.xlu0 %1611
    %v1613 = vsel %vm30, %v1609, 0.0
    %1614 = vadd.xlane.f32.xlu0 %v1613
    %v1615 = vpop.xlane.xlu0 %1614
    %v1616 = vmul.f32 %v1612, 0.032258064
    %v1617 = vmul.f32 %v1615, 0.032258064
    %v1618 = vadd.f32 %v1616, 1e-05
    %v1619 = vadd.f32 %v1617, 1e-05
    %v1620 = vrsqrt.pop %v1618
    %v1621 = vmul.f32 %v1620, %v1618
    %v1622 = vmul.f32 %v1621, %v1620
    %v1623 = vmul.f32 0.5, %v1622
    %v1624 = vsub.f32 1.5, %v1623
    %v1625 = vmul.f32 %v1620, %v1624
    %vm1626 = vweird.f32 %v1618
    %vm1627 = vweird.f32 %v1620
    %vm1628 = vmor %vm1626, %vm1627
    %v1629 = vsel %vm1628, %v1620, %v1625
    %v1630 = vrsqrt.pop %v1619
    %v1631 = vmul.f32 %v1630, %v1619
    %v1632 = vmul.f32 %v1631, %v1630
    %v1633 = vmul.f32 0.5, %v1632
    %v1634 = vsub.f32 1.5, %v1633
    %v1635 = vmul.f32 %v1630, %v1634
    %vm1636 = vweird.f32 %v1619
    %vm1637 = vweird.f32 %v1630
    %vm1638 = vmor %vm1636, %vm1637
    %v1639 = vsel %vm1638, %v1630, %v1635
    %v1640 = vperm.slane %v29, 2
    %v1641 = vmul.f32 %v1640, %v1629
    %v1642 = vmul.f32 %v1640, %v1639
    %v1643 = vmul.f32 %v1606, %v1641
    %v1644 = vmul.f32 %v1607, %v1642
    %v1645 = vperm.slane %v29, 3
    %v1646 = vadd.f32 %v1643, %v1645
    %v1647 = vadd.f32 %v1644, %v1645
    %v1648 = vld [vmem:[%s3] sm:$0xff]
    %v1649 = vld [vmem:[%s3 + $0x8] sm:$0xff]
    %v1650 = vld [vmem:[%s3 + $0x10] sm:$0xff]
    %v1651 = vld [vmem:[%s3 + $0x18] sm:$0xff]
    %v1652 = vperm.slane %v29, 7
    %v1654 = vsel %vm30, %v1646, 0
    %v1657 = vsel %vm30, %v1647, 0
    %1659 = vmatpush.msra.mxu0 0.0
    %1660 = vmatpush.msra.mxu0 0.0
    %1661 = vmatpush.msra.mxu0 0.0
    %1662 = vmatpush.msra.mxu0 0.0
    %1663 = vmatpush.msra.mxu0 0.0
    %1664 = vmatpush.msra.mxu0 0.0
    %1665 = vmatpush.msra.mxu0 0.0
    %1666 = vmatpush.msra.mxu0 0.0
    %1667 = vmatpush.msra.mxu0 0.0
    %1668 = vmatpush.msra.mxu0 0.0
    %1669 = vmatpush.msra.mxu0 0.0
    %1670 = vmatpush.msra.mxu0 0.0
    %1671 = vmatpush.msra.mxu0 %v1651
    %1672 = vmatpush.msra.mxu0 %v1650
    %1673 = vmatpush.msra.mxu0 %v1649
    %1674 = vmatpush.msra.mxu0 %v1648
    %1675 = vmatmul.f32.gmra.mxu0 %v1654
    %v1676 = vpop.f32.mrf.mxu0
    %v1677 = vadd.f32 %v1652, %v1676
    %1678 = vmatmul.f32.gmra.mxu0 %v1657
    %v1679 = vpop.f32.mrf.mxu0
    %v1680 = vadd.f32 %v1652, %v1679
    %1681 = vdwg.mxu0
    %v1682 = vmul.f32 %v1677, 0.5
    %v1683 = vmul.f32 %v1680, 0.5
    %v1684 = vmul.f32 %v1677, %v1677
    %v1685 = vmul.f32 %v1680, %v1680
    %v1686 = vmul.f32 %v1677, %v1684
    %v1687 = vmul.f32 %v1680, %v1685
    %v1688 = vmul.f32 %v1686, 0.044715
    %v1689 = vmul.f32 %v1687, 0.044715
    %v1690 = vadd.f32 %v1677, %v1688
    %v1691 = vadd.f32 %v1680, %v1689
    %v1692 = vmul.f32 %v1690, 0.7978846
    %v1693 = vmul.f32 %v1691, 0.7978846
    %v1694 = vtanh.pop %v1692
    %v1695 = vtanh.pop %v1693
    %v1696 = vadd.f32 %v1694, 1.0
    %v1697 = vadd.f32 %v1695, 1.0
    %v1698 = vmul.f32 %v1682, %v1696
    %v1699 = vmul.f32 %v1683, %v1697
    %v1700 = vld [vmem:[%s4] sm:$0xff]
    %v1701 = vld [vmem:[%s4 + $0x8] sm:$0xff]
    %v1702 = vld [vmem:[%s4 + $0x10] sm:$0xff]
    %v1703 = vld [vmem:[%s4 + $0x18] sm:$0xff]
    %v1704 = vld [vmem:[%s4 + $0x20] sm:$0xff]
    %v1705 = vld [vmem:[%s4 + $0x28] sm:$0xff]
    %v1706 = vld [vmem:[%s4 + $0x30] sm:$0xff]
    %v1707 = vld [vmem:[%s4 + $0x38] sm:$0xff]
    %v1708 = vld [vmem:[%s4 + $0x40] sm:$0xff]
    %v1709 = vld [vmem:[%s4 + $0x48] sm:$0xff]
    %v1710 = vld [vmem:[%s4 + $0x50] sm:$0xff]
    %v1711 = vld [vmem:[%s4 + $0x58] sm:$0xff]
    %v1712 = vld [vmem:[%s4 + $0x60] sm:$0xff]
    %v1713 = vld [vmem:[%s4 + $0x68] sm:$0xff]
    %v1714 = vld [vmem:[%s4 + $0x70] sm:$0xff]
    %v1715 = vld [vmem:[%s4 + $0x78] sm:$0xff]
    %v1716 = vperm.slane %v29, 5
    %1717 = vmatpush.msra.mxu0 %v1715
    %1718 = vmatpush.msra.mxu0 %v1714
    %1719 = vmatpush.msra.mxu0 %v1713
    %1720 = vmatpush.msra.mxu0 %v1712
    %1721 = vmatpush.msra.mxu0 %v1711
    %1722 = vmatpush.msra.mxu0 %v1710
    %1723 = vmatpush.msra.mxu0 %v1709
    %1724 = vmatpush.msra.mxu0 %v1708
    %1725 = vmatpush.msra.mxu0 %v1707
    %1726 = vmatpush.msra.mxu0 %v1706
    %1727 = vmatpush.msra.mxu0 %v1705
    %1728 = vmatpush.msra.mxu0 %v1704
    %1729 = vmatpush.msra.mxu0 %v1703
    %1730 = vmatpush.msra.mxu0 %v1702
    %1731 = vmatpush.msra.mxu0 %v1701
    %1732 = vmatpush.msra.mxu0 %v1700
    %1733 = vmatmul.f32.gmra.mxu0 %v1698
    %v1734 = vpop.f32.mrf.mxu0
    %v1735 = vadd.f32 %v1716, %v1734
    %1736 = vmatmul.f32.gmra.mxu0 %v1699
    %v1737 = vpop.f32.mrf.mxu0
    %v1738 = vadd.f32 %v1716, %v1737
    %1739 = vdwg.mxu0
    %v1740 = vadd.f32 %v1596, %v1735
    %v1741 = vadd.f32 %v1597, %v1738
    %1742 = vst.msk [vmem:[#allocation2] sm:$0xff] %vm30, %v1740
    %1743 = vst.msk [vmem:[#allocation2 + $0x8] sm:$0xff] %vm30, %v1741
    // Predicated region
    $region30: #{transformer_block.1} parent=1 // pred_check
      _
    $region31: #{transformer_block.1} parent=1 // pred_check_branch
      %1745 = sbr.rel (0) target = $region33
    $region32: #{transformer_block.1} parent=1 // pred_region
      %1747 = vsyncadd [#allocation3], 0
      %s1748 = sshll.u32 [#allocation2], 4
      %s1749 = int_to_ptr.vmem [resolvable:$true] %s1748
      %s1750 = sshll.u32 %s7, 4
      %s1751 = int_to_ptr.hbm [resolvable:$true] %s1750
      %1756 = dma.vmem_to_hbm [thread:$0]  %s1749, 256, %s1751, [#allocation3], 128, 128, 8
    $region33: #{transformer_block.1} parent=1 // pred_fallthru
      _
    // Predicated region
    $region34: #{transformer_block.1} parent=1 // pred_check
      _
    $region35: #{transformer_block.1} parent=1 // pred_check_branch
      %1758 = sbr.rel (0) target = $region37
    $region36: #{transformer_block.1} parent=1 // pred_region
      %1760 = dma.done [#allocation3], 256
    $region37: #{transformer_block.1} parent=1 // pred_fallthru
      _
    %1761 = vsyncpa [#allocation3], 1

</llo_original>
